<compile_context>
chip_gen: v7x
topology: tpu7x:2x2x1
jax: 0.10.0
libtpu: 0.0.40
codegen_flags: <defaults>
</compile_context>

<pallas_src>
import functools

import jax
import jax.numpy as jnp
from jax.experimental import pallas as pl
from jax.experimental.pallas import tpu as pltpu


def _round_up(x, m):
    return -(-x // m) * m


def wide_conv_skip_kernel(data_col_ref, data_row_ref, wconv_ref, bconv_ref,
                          adj_ref, merge_ref, wt_ref, bt_ref,
                          o_ref, neigh_acc, deg_acc,
                          *, ow, n_cols, fold_deg, needs_col_mask):
    k = pl.program_id(1)

    @pl.when(k == 0)
    def _init():
        neigh_acc[...] = jnp.zeros_like(neigh_acc)
        if not fold_deg:
            deg_acc[...] = jnp.zeros_like(deg_acc)

    # Neighbor-block conv output, recomputed on the fly (bias-free: the bias
    # contribution through the adjacency is exactly deg * b_conv, added once in
    # the epilogue).  Cast to bf16 so the dominant matmul stays on the fast
    # bf16 MXU path with f32 accumulation.
    conv_k = jnp.dot(data_col_ref[...], wconv_ref[...],
                     preferred_element_type=jnp.float32
                     ).astype(jnp.bfloat16)                       # (tk, OWp)

    adj_t = adj_ref[...]                                          # (tm, tk)
    if adj_t.dtype != jnp.bfloat16:
        # int8 / f32 storage: upcast via f32 (universally supported convert)
        # and land in bf16 -- 0/1 adjacency values are exact in bf16.
        # TODO(synk): use a direct int8->bf16 convert once verified on all gens.
        adj_t = adj_t.astype(jnp.float32).astype(jnp.bfloat16)
    if needs_col_mask:
        # Edge column tile: zero lanes past the real adjacency width so
        # out-of-bounds garbage never reaches the accumulators.
        col0 = k * adj_t.shape[1]
        lane = jax.lax.broadcasted_iota(jnp.int32, (1, adj_t.shape[1]), 1)
        adj_t = jnp.where(lane < (n_cols - col0), adj_t, 0)

    # bf16 x bf16 -> f32-accumulated MXU matmul over the N^2-dominant stream.
    neigh_acc[...] += jnp.dot(adj_t, conv_k,
                              preferred_element_type=jnp.float32)
    if not fold_deg:
        # Fallback when OW is already a multiple of 128 (no spare lane):
        # accumulate degrees in f32 with an explicit cross-lane reduce.
        deg_acc[...] += jnp.sum(adj_t.astype(jnp.float32), axis=1,
                                keepdims=True)

    @pl.when(k == pl.num_programs(1) - 1)
    def _finalize():
        b_conv = bconv_ref[...]                                   # (1, OWp) f32
        neigh = neigh_acc[...]                                    # (tm, OWp) f32
        if fold_deg:
            deg = neigh[:, ow:ow + 1]     # degree rode along in the spare lane
        else:
            deg = deg_acc[...]
        inv_deg = pl.reciprocal(jnp.maximum(deg, 1.0), approx=True)
        conv_i = jnp.dot(data_row_ref[...], wconv_ref[...],
                         preferred_element_type=jnp.float32) + b_conv
        # conv-bias through the adjacency: adj @ (conv + b) = adj@conv + deg*b.
        neigh = neigh + deg * b_conv
        lap = conv_i - neigh * inv_deg
        trans = jnp.dot(merge_ref[...], wt_ref[...],
                        preferred_element_type=jnp.float32) + bt_ref[...]
        o_ref[...] = jnp.maximum(lap + trans, 0.0).astype(o_ref.dtype)


def wide_conv_skip(data, merge, adj, w_conv, b_conv, w_t, b_t,
                   *, in_size, out_size, width,
                   tm_target=512, tk_target=2048):
    assert tm_target % 32 == 0 and tk_target % 128 == 0
    N, IW = data.shape
    assert IW == in_size * width
    assert adj.shape == (N, N)
    OW = out_size * width
    M = merge.shape[1]

    OWp = _round_up(OW, 128)           # lane-dense output / weight columns
    # Fold the degree into a spare output lane whenever one exists (OW not a
    # multiple of 128); otherwise fall back to an explicit degree accumulator.
    fold_deg = OW < OWp
    IWp = IW + 1 if fold_deg else IW

    # ---- pack grouped 1x1 conv weight (OW, in_size, 1) as block-diag (IWp, OWp)
    w = jnp.squeeze(w_conv, -1).astype(jnp.float32)               # (OW, in_size)
    wbd = jnp.zeros((IWp, OWp), jnp.float32)
    for g in range(width):
        blk = w[g * out_size:(g + 1) * out_size, :]               # (out_size, in_size)
        wbd = wbd.at[g * in_size:(g + 1) * in_size,
                     g * out_size:(g + 1) * out_size].set(blk.T)
    if fold_deg:
        wbd = wbd.at[IW, OW].set(1.0)   # routes the constant-1 data column to
                                        # lane OW -> degree computed by the MXU
    # TODO(synk): for large `width` the block-diagonal packing wastes
    # (width-1)/width of the conv flops/bytes; switch to a batched per-group dot.

    # ---- adjacency: stream the caller's buffer as-is (no N^2 pad/cast pass).
    # Only graphs smaller than one lane tile get a one-off tiny pad.
    if N < 128:
        Na = 128
        adj_in = jnp.pad(adj, ((0, Na - N), (0, Na - N)))   # stays in adj.dtype
    else:
        Na = N
        adj_in = adj

    # ---- tiles: big enough that per-step work >> ~0.35us grid overhead, never
    # collapsed by gcd; tm capped so the "parallel" row axis has >= 2 tiles
    # (keeps both v7x TensorCores busy).  tm multiple of 32 (int8 sublane tile),
    # tk multiple of 128 (lane tile).
    tk = min(tk_target, (Na // 128) * 128)
    tm = max(32, min(tm_target, _round_up((Na + 1) // 2, 32)))
    n_row = -(-Na // tm)
    n_col = -(-Na // tk)
    needs_col_mask = (Na % tk) != 0
    Nout = n_row * tm                    # padded output rows (sliced at the end)
    Nd = max(n_row * tm, n_col * tk)     # rows the data blocks may touch

    # ---- small per-node operands: bf16 MXU operands, f32 biases (O(N*IW), cheap)
    data_b = data.astype(jnp.bfloat16)
    if fold_deg:
        data_b = jnp.concatenate(
            [data_b, jnp.ones((N, 1), jnp.bfloat16)], axis=1)    # constant-1 col
    data_p = jnp.pad(data_b, ((0, Nd - N), (0, 0)))
    merge_p = jnp.pad(merge.astype(jnp.bfloat16), ((0, Nd - N), (0, 0)))

    wbd_b = wbd.astype(jnp.bfloat16)
    wt_b = jnp.pad(w_t.astype(jnp.bfloat16), ((0, 0), (0, OWp - OW)))
    bconv_p = jnp.pad(b_conv.reshape(1, OW).astype(jnp.float32),
                      ((0, 0), (0, OWp - OW)))
    bt_p = jnp.pad(b_t.reshape(1, OW).astype(jnp.float32),
                   ((0, 0), (0, OWp - OW)))

    kernel = functools.partial(wide_conv_skip_kernel, ow=OW, n_cols=Na,
                               fold_deg=fold_deg,
                               needs_col_mask=needs_col_mask)

    out = pl.pallas_call(
        kernel,
        grid=(n_row, n_col),
        in_specs=[
            pl.BlockSpec((tk, IWp), lambda i, k: (k, 0)),   # data, neighbor block
            pl.BlockSpec((tm, IWp), lambda i, k: (i, 0)),   # data, row block
            pl.BlockSpec((IWp, OWp), lambda i, k: (0, 0)),  # block-diag conv W (bf16)
            pl.BlockSpec((1, OWp), lambda i, k: (0, 0)),    # conv bias (f32)
            # N^2-dominant stream; bump to pipeline_mode=pl.Buffered(3) if
            # bundle dumps show exposed DMA once per-step compute shrinks.
            pl.BlockSpec((tm, tk), lambda i, k: (i, k)),    # adjacency tile
            pl.BlockSpec((tm, M), lambda i, k: (i, 0)),     # merge rows (bf16)
            pl.BlockSpec((M, OWp), lambda i, k: (0, 0)),    # transform W (bf16)
            pl.BlockSpec((1, OWp), lambda i, k: (0, 0)),    # transform bias (f32)
        ],
        out_specs=pl.BlockSpec((tm, OWp), lambda i, k: (i, 0)),
        out_shape=jax.ShapeDtypeStruct((Nout, OWp), jnp.float32),
        scratch_shapes=[
            pltpu.VMEM((tm, OWp), jnp.float32),  # neighbor-sum (+deg lane) acc
            pltpu.VMEM((tm, 1), jnp.float32),    # degree acc (fallback path only)
        ],
        compiler_params=pltpu.CompilerParams(
            dimension_semantics=("parallel", "arbitrary"),
            # At the default targets (tm=512, tk=2048) the adjacency double
            # buffer is 2-4 MiB and everything else < 2 MiB; 32 MiB raises the
            # v5e 16 MiB scoped default and stays far below v7x's 64 MiB.
            vmem_limit_bytes=32 * 1024 * 1024,
        ),
    )(data_p, data_p, wbd_b, bconv_p, adj_in, merge_p, wt_b, bt_p)

    return out[:N, :OW]


def reference(data, merge, adj, w_conv, b_conv, w_t, b_t,
              *, in_size, out_size, width):
    w = jnp.squeeze(w_conv, -1)
    outs = []
    for g in range(width):
        x = data[:, g * in_size:(g + 1) * in_size]
        wg = w[g * out_size:(g + 1) * out_size, :]
        bg = b_conv[g * out_size:(g + 1) * out_size]
        outs.append(x @ wg.T + bg)
    out = jnp.concatenate(outs, axis=1)
    deg = adj.sum(axis=1, keepdims=True)
    lap = out - (adj @ out) / jnp.maximum(deg, 1.0)
    trans = merge @ w_t + b_t
    return jnp.maximum(lap + trans, 0.0)


if __name__ == "__main__":
    # Small but representative graph: 256 nodes -> two row tiles (both v7x
    # TensorCores busy), width-3 grouped conv with 24-wide features.
    N, in_size, out_size, merge_size, width = 256, 8, 8, 16, 3
    IW, OW = in_size * width, out_size * width

    key = jax.random.PRNGKey(0)
    k = jax.random.split(key, 6)
    data = jax.random.normal(k[0], (N, IW), jnp.float32)
    merge = jax.random.normal(k[1], (N, merge_size), jnp.float32)
    # deterministic synthetic parameters (shapes from nn.Conv1d / nn.Linear)
    w_conv = 0.1 * jax.random.normal(k[2], (OW, in_size, 1), jnp.float32)
    b_conv = 0.1 * jax.random.normal(k[3], (OW,), jnp.float32)
    w_t = 0.1 * jax.random.normal(k[4], (merge_size, OW), jnp.float32)
    b_t = 0.1 * jax.random.normal(k[5], (OW,), jnp.float32)

    # ring-graph adjacency as the "structure" (every node has degree 2), stored
    # as int8: halves the dominant N^2 HBM stream vs bf16; cast to bf16 per
    # tile inside the kernel (0/1 values are exact).
    idx = jnp.arange(N)
    adj = (((idx[:, None] - idx[None, :]) % N == 1) |
           ((idx[None, :] - idx[:, None]) % N == 1)).astype(jnp.int8)

    out = wide_conv_skip(data, merge, adj, w_conv, b_conv, w_t, b_t,
                         in_size=in_size, out_size=out_size, width=width)
    out = jax.block_until_ready(out)

    # Reference at matched operand precision (the kernel feeds the MXU bf16
    # operands with f32 accumulation).
    bf = lambda x: x.astype(jnp.bfloat16).astype(jnp.float32)
    ref = reference(bf(data), bf(merge), adj.astype(jnp.float32),
                    bf(w_conv), b_conv, bf(w_t), b_t,
                    in_size=in_size, out_size=out_size, width=width)

    assert out.shape == (N, OW)
    max_err = float(jnp.max(jnp.abs(out - ref)))
    assert jnp.allclose(out, ref, atol=3e-2, rtol=3e-2), \
        f"mismatch vs reference (max abs err {max_err})"
    print("KERNEL_OK")
</pallas_src>

<mosaic_0001>
module attributes {stable_mosaic.version = 11 : i64} {
  func.func @wide_conv_skip_kernel(%arg0: i32, %arg1: i32, %arg2: memref<256x25xbf16, #tpu.memory_space<vmem>>, %arg3: memref<128x25xbf16, #tpu.memory_space<vmem>>, %arg4: memref<25x128xbf16, #tpu.memory_space<vmem>>, %arg5: memref<1x128xf32, #tpu.memory_space<vmem>>, %arg6: memref<128x256xi8, #tpu.memory_space<vmem>>, %arg7: memref<128x16xbf16, #tpu.memory_space<vmem>>, %arg8: memref<16x128xbf16, #tpu.memory_space<vmem>>, %arg9: memref<1x128xf32, #tpu.memory_space<vmem>>, %arg10: memref<128x128xf32, #tpu.memory_space<vmem>>, %arg11: memref<128x128xf32, #tpu.memory_space<vmem>>, %arg12: memref<128x1xf32, #tpu.memory_space<vmem>>) attributes {dimension_semantics = [#tpu.dimension_semantics<parallel>, #tpu.dimension_semantics<arbitrary>], iteration_bounds = array<i64: 2, 1>, scalar_prefetch = 0 : i64, scratch_operands = 2 : i64, tpu.core_type = #tpu.core_type<tc>, window_params = [{transform_indices = @transform_0, window_bounds = array<i64: 256, 25>}, {transform_indices = @transform_1, window_bounds = array<i64: 128, 25>}, {pipeline_mode = #tpu.pipeline_mode<synchronous>, transform_indices = @transform_2, window_bounds = array<i64: 25, 128>}, {pipeline_mode = #tpu.pipeline_mode<synchronous>, transform_indices = @transform_3, window_bounds = array<i64: 1, 128>}, {transform_indices = @transform_4, window_bounds = array<i64: 128, 256>}, {transform_indices = @transform_5, window_bounds = array<i64: 128, 16>}, {pipeline_mode = #tpu.pipeline_mode<synchronous>, transform_indices = @transform_6, window_bounds = array<i64: 16, 128>}, {pipeline_mode = #tpu.pipeline_mode<synchronous>, transform_indices = @transform_7, window_bounds = array<i64: 1, 128>}, {transform_indices = @transform_8, window_bounds = array<i64: 128, 128>}]} {
    %c0_i32 = arith.constant 0 : i32
    %0 = arith.cmpi eq, %arg1, %c0_i32 : i32
    %1 = arith.extui %0 : i1 to i32
    %c0_i32_0 = arith.constant 0 : i32
    %2 = arith.cmpi ne, %1, %c0_i32_0 : i32
    scf.if %2 {
      %cst_13 = arith.constant 0.000000e+00 : f32
      %17 = vector.broadcast %cst_13 : f32 to vector<128x128xf32>
      %c0_14 = arith.constant 0 : index
      %c0_15 = arith.constant 0 : index
      %18 = vector.load %arg11[%c0_14, %c0_15] : memref<128x128xf32, #tpu.memory_space<vmem>>, vector<128x128xf32>
      tpu.vector_store %arg11[%c0_14, %c0_15], %17 {strides = array<i32>} : memref<128x128xf32, #tpu.memory_space<vmem>>, vector<128x128xf32>,
    } else {
    }
    %c0 = arith.constant 0 : index
    %c0_1 = arith.constant 0 : index
    %3 = vector.load %arg2[%c0, %c0_1] : memref<256x25xbf16, #tpu.memory_space<vmem>>, vector<256x25xbf16>
    %c0_2 = arith.constant 0 : index
    %c0_3 = arith.constant 0 : index
    %4 = vector.load %arg4[%c0_2, %c0_3] : memref<25x128xbf16, #tpu.memory_space<vmem>>, vector<25x128xbf16>
    %cst = arith.constant dense<0.000000e+00> : vector<256x128xf32>
    %5 = tpu.matmul %3, %4, %cst {dimension_numbers = #tpu.dot_dimension_numbers<[1], [0], [0], [1], [0, 0, 1, 1], [], []>} : vector<256x25xbf16>, vector<25x128xbf16>, vector<256x128xf32> -> vector<256x128xf32>
    %6 = arith.truncf %5 : vector<256x128xf32> to vector<256x128xbf16>
    %c0_4 = arith.constant 0 : index
    %c0_5 = arith.constant 0 : index
    %7 = vector.load %arg6[%c0_4, %c0_5] : memref<128x256xi8, #tpu.memory_space<vmem>>, vector<128x256xi8>
    %8 = arith.sitofp %7 : vector<128x256xi8> to vector<128x256xf32>
    %9 = arith.truncf %8 : vector<128x256xf32> to vector<128x256xbf16>
    %c0_6 = arith.constant 0 : index
    %c0_7 = arith.constant 0 : index
    %10 = vector.load %arg11[%c0_6, %c0_7] : memref<128x128xf32, #tpu.memory_space<vmem>>, vector<128x128xf32>
    %cst_8 = arith.constant dense<0.000000e+00> : vector<128x128xf32>
    %11 = tpu.matmul %9, %6, %cst_8 {dimension_numbers = #tpu.dot_dimension_numbers<[1], [0], [0], [1], [0, 0, 1, 1], [], []>} : vector<128x256xbf16>, vector<256x128xbf16>, vector<128x128xf32> -> vector<128x128xf32>
    %12 = arith.addf %10, %11 : vector<128x128xf32>
    %c0_9 = arith.constant 0 : index
    %c0_10 = arith.constant 0 : index
    %13 = vector.load %arg11[%c0_9, %c0_10] : memref<128x128xf32, #tpu.memory_space<vmem>>, vector<128x128xf32>
    tpu.vector_store %arg11[%c0_9, %c0_10], %12 {strides = array<i32>} : memref<128x128xf32, #tpu.memory_space<vmem>>, vector<128x128xf32>,
    %c0_i32_11 = arith.constant 0 : i32
    %14 = arith.cmpi eq, %arg1, %c0_i32_11 : i32
    %15 = arith.extui %14 : i1 to i32
    %c0_i32_12 = arith.constant 0 : i32
    %16 = arith.cmpi ne, %15, %c0_i32_12 : i32
    scf.if %16 {
      %c0_13 = arith.constant 0 : index
      %c0_14 = arith.constant 0 : index
      %17 = vector.load %arg5[%c0_13, %c0_14] : memref<1x128xf32, #tpu.memory_space<vmem>>, vector<1x128xf32>
      %c0_15 = arith.constant 0 : index
      %c0_16 = arith.constant 0 : index
      %18 = vector.load %arg11[%c0_15, %c0_16] : memref<128x128xf32, #tpu.memory_space<vmem>>, vector<128x128xf32>
      %19 = vector.extract_strided_slice %18 {offsets = [0, 24], sizes = [128, 1], strides = [1, 1]} : vector<128x128xf32> to vector<128x1xf32>
      %cst_17 = arith.constant 1.000000e+00 : f32
      %20 = vector.broadcast %cst_17 : f32 to vector<128x1xf32>
      %21 = arith.maximumf %19, %20 : vector<128x1xf32>
      %22 = tpu.reciprocal %21 {approx = true} : vector<128x1xf32> -> vector<128x1xf32>
      %c0_18 = arith.constant 0 : index
      %c0_19 = arith.constant 0 : index
      %23 = vector.load %arg3[%c0_18, %c0_19] : memref<128x25xbf16, #tpu.memory_space<vmem>>, vector<128x25xbf16>
      %c0_20 = arith.constant 0 : index
      %c0_21 = arith.constant 0 : index
      %24 = vector.load %arg4[%c0_20, %c0_21] : memref<25x128xbf16, #tpu.memory_space<vmem>>, vector<25x128xbf16>
      %cst_22 = arith.constant dense<0.000000e+00> : vector<128x128xf32>
      %25 = tpu.matmul %23, %24, %cst_22 {dimension_numbers = #tpu.dot_dimension_numbers<[1], [0], [0], [1], [0, 0, 1, 1], [], []>} : vector<128x25xbf16>, vector<25x128xbf16>, vector<128x128xf32> -> vector<128x128xf32>
      %26 = vector.broadcast %17 : vector<1x128xf32> to vector<128x128xf32>
      %27 = arith.addf %25, %26 : vector<128x128xf32>
      %28 = vector.broadcast %19 : vector<128x1xf32> to vector<128x128xf32>
      %29 = vector.broadcast %17 : vector<1x128xf32> to vector<128x128xf32>
      %30 = arith.mulf %28, %29 : vector<128x128xf32>
      %31 = arith.addf %18, %30 : vector<128x128xf32>
      %32 = vector.broadcast %22 : vector<128x1xf32> to vector<128x128xf32>
      %33 = arith.mulf %31, %32 : vector<128x128xf32>
      %34 = arith.subf %27, %33 : vector<128x128xf32>
      %c0_23 = arith.constant 0 : index
      %c0_24 = arith.constant 0 : index
      %35 = vector.load %arg7[%c0_23, %c0_24] : memref<128x16xbf16, #tpu.memory_space<vmem>>, vector<128x16xbf16>
      %c0_25 = arith.constant 0 : index
      %c0_26 = arith.constant 0 : index
      %36 = vector.load %arg8[%c0_25, %c0_26] : memref<16x128xbf16, #tpu.memory_space<vmem>>, vector<16x128xbf16>
      %cst_27 = arith.constant dense<0.000000e+00> : vector<128x128xf32>
      %37 = tpu.matmul %35, %36, %cst_27 {dimension_numbers = #tpu.dot_dimension_numbers<[1], [0], [0], [1], [0, 0, 1, 1], [], []>} : vector<128x16xbf16>, vector<16x128xbf16>, vector<128x128xf32> -> vector<128x128xf32>
      %c0_28 = arith.constant 0 : index
      %c0_29 = arith.constant 0 : index
      %38 = vector.load %arg9[%c0_28, %c0_29] : memref<1x128xf32, #tpu.memory_space<vmem>>, vector<1x128xf32>
      %39 = vector.broadcast %38 : vector<1x128xf32> to vector<128x128xf32>
      %40 = arith.addf %37, %39 : vector<128x128xf32>
      %41 = arith.addf %34, %40 : vector<128x128xf32>
      %cst_30 = arith.constant 0.000000e+00 : f32
      %42 = vector.broadcast %cst_30 : f32 to vector<128x128xf32>
      %43 = arith.maximumf %41, %42 : vector<128x128xf32>
      %c0_31 = arith.constant 0 : index
      %c0_32 = arith.constant 0 : index
      %44 = vector.load %arg10[%c0_31, %c0_32] : memref<128x128xf32, #tpu.memory_space<vmem>>, vector<128x128xf32>
      tpu.vector_store %arg10[%c0_31, %c0_32], %43 {strides = array<i32>} : memref<128x128xf32, #tpu.memory_space<vmem>>, vector<128x128xf32>,
    } else {
    }
    return
  }
  func.func @transform_0(%arg0: i32, %arg1: i32) -> (i32, i32) {
    %c0_i32 = arith.constant 0 : i32
    %c0_i32_0 = arith.constant 0 : i32
    return %arg1, %c0_i32 : i32, i32
  }
  func.func @transform_1(%arg0: i32, %arg1: i32) -> (i32, i32) {
    %c0_i32 = arith.constant 0 : i32
    %c0_i32_0 = arith.constant 0 : i32
    return %arg0, %c0_i32 : i32, i32
  }
  func.func @transform_2(%arg0: i32, %arg1: i32) -> (i32, i32) {
    %c0_i32 = arith.constant 0 : i32
    %c0_i32_0 = arith.constant 0 : i32
    %c0_i32_1 = arith.constant 0 : i32
    return %c0_i32, %c0_i32_0 : i32, i32
  }
  func.func @transform_3(%arg0: i32, %arg1: i32) -> (i32, i32) {
    %c0_i32 = arith.constant 0 : i32
    %c0_i32_0 = arith.constant 0 : i32
    %c0_i32_1 = arith.constant 0 : i32
    return %c0_i32, %c0_i32_0 : i32, i32
  }
  func.func @transform_4(%arg0: i32, %arg1: i32) -> (i32, i32) {
    %c0_i32 = arith.constant 0 : i32
    return %arg0, %arg1 : i32, i32
  }
  func.func @transform_5(%arg0: i32, %arg1: i32) -> (i32, i32) {
    %c0_i32 = arith.constant 0 : i32
    %c0_i32_0 = arith.constant 0 : i32
    return %arg0, %c0_i32 : i32, i32
  }
  func.func @transform_6(%arg0: i32, %arg1: i32) -> (i32, i32) {
    %c0_i32 = arith.constant 0 : i32
    %c0_i32_0 = arith.constant 0 : i32
    %c0_i32_1 = arith.constant 0 : i32
    return %c0_i32, %c0_i32_0 : i32, i32
  }
  func.func @transform_7(%arg0: i32, %arg1: i32) -> (i32, i32) {
    %c0_i32 = arith.constant 0 : i32
    %c0_i32_0 = arith.constant 0 : i32
    %c0_i32_1 = arith.constant 0 : i32
    return %c0_i32, %c0_i32_0 : i32, i32
  }
  func.func @transform_8(%arg0: i32, %arg1: i32) -> (i32, i32) {
    %c0_i32 = arith.constant 0 : i32
    %c0_i32_0 = arith.constant 0 : i32
    return %arg0, %c0_i32 : i32, i32
  }
}

</mosaic_0001>

<llo_original>
// kernel: tpu_custom_call.1
$region0: #{tpu_custom_call.1}
  #allocation0 [shape = 'u32[]', space=smem, size = 0x4, offset = 0x4, fixed_abs, tag = 'smem constant byte address 0x4 - core index']
  #allocation1 [shape = 'u32[144,128]{1,0:T(1,128)}', space=vmem, size = 0x12000, scoped, tag = 'internal scratch']
  #allocation2 [shape = 'f32[128,128]{1,0:T(8,128)}', space=vmem, size = 0x10000, scoped, tag = 'scratch operand']
  #allocation3 [shape = 'f32[128,1]{1,0:T(8,128)}', space=vmem, size = 0x10000, scoped, tag = 'scratch operand']
  %s0 = inlined_call_operand.vmem [shape: bf16[256,25], index: 0, kind: input, shape index: {}]
  %s1 = inlined_call_operand.vmem [shape: bf16[256,25], index: 1, kind: input, shape index: {}]
  %s2 = inlined_call_operand.vmem [shape: bf16[25,128], index: 2, kind: input, shape index: {}]
  %s3 = inlined_call_operand.vmem [shape: f32[1,128], index: 3, kind: input, shape index: {}]
  %s4 = inlined_call_operand.vmem [shape: s8[256,256], index: 4, kind: input, shape index: {}]
  %s5 = inlined_call_operand.vmem [shape: bf16[256,16], index: 5, kind: input, shape index: {}]
  %s6 = inlined_call_operand.vmem [shape: bf16[16,128], index: 6, kind: input, shape index: {}]
  %s7 = inlined_call_operand.vmem [shape: f32[1,128], index: 7, kind: input, shape index: {}]
  %s8 = inlined_call_operand.hbm [shape: f32[256,128], index: 8, kind: output, shape index: {}]
  %s9 = sld [smem:[#allocation0]]
  $region73: #{tpu_custom_call.1} parent=0
    _
  %s11 = ssub.s32 1, %s9
  %s12 = scalar_select 0, %s11, %s9
  $region1: #{tpu_custom_call.1} parent=0
    #allocation4 [shape = 'u8[131072]{0}', space=vmem, size = 0x20000, scoped, tag = 'output window, operand 0']
    #allocation5 [shape = 's32[2]{0}', space=sflag, size = 0x8, scoped, tag = 'scoped memory for tpu_custom_call.1']
    %13 = vsyncpa [#allocation5], 0
    %s14 = scalar_lea.sflag [#allocation5], 1
    %15 = vsyncpa %s14, 0
    loop: start=0, step=1, limit=4
    $region2: #{tpu_custom_call.1} parent=1 // loop_pre_header
      _
    $region3: #{tpu_custom_call.1} parent=1 // loop_header
      %s17 = sphi 0, %s21
      %p18 = scmp.ge.s32.totalorder %s17, 4
      %s24 = sphi 0, %s36
      %s25 = sphi 0, %s32
      %s26 = sphi 0, %s24
      %s27 = sphi 0, %s25
      %s28 = sphi 0, %s26
      %s29 = sphi 0, %s27
      %s39 = sphi 0, %s41
      %s42 = sphi 0, %s39
      %s43 = sphi 0, %s42
      %s59 = sphi 0, %s43
      %s65 = sphi 0, %s67
      %s68 = sphi 0, %s65
      %s69 = sphi 0, %s68
      %s85 = sphi 0, %s69
      %s89 = sphi 0, %s89
      %s91 = sphi 0, %s89
      %s92 = sphi 0, %s91
      %s106 = sphi 0, %s92
      %s110 = sphi 0, %s110
      %s112 = sphi 0, %s110
      %s113 = sphi 0, %s112
      %s127 = sphi 0, %s113
      %s135 = sphi 0, %s137
      %s138 = sphi 0, %s135
      %s139 = sphi 0, %s138
      %s155 = sphi 0, %s139
      %s161 = sphi 0, %s163
      %s164 = sphi 0, %s161
      %s165 = sphi 0, %s164
      %s181 = sphi 0, %s165
      %s185 = sphi 0, %s185
      %s187 = sphi 0, %s185
      %s188 = sphi 0, %s187
      %s202 = sphi 0, %s188
      %s206 = sphi 0, %s206
      %s208 = sphi 0, %s206
      %s209 = sphi 0, %s208
      %s223 = sphi 0, %s209
      %s229 = sphi 0, %s231
      %s232 = sphi 0, %s229
      %s233 = sphi 0, %s232
      %s249 = sphi 0, %s233
    $region4: #{tpu_custom_call.1} parent=1 // loop_header_branch
      %20 = sbr.rel (%p18) target = $region8
    $region5: #{tpu_custom_call.1} parent=1 // loop_body
      %s22 = ssub.s32 %s17, 1
      %s23 = ssub.s32 %s17, 2
      %s30 = sadd.s32 1, %s25
      %p31 = scmp.ge.s32.totalorder %s30, 1
      %s32 = scalar_select %p31, 0, %s30
      %s33 = sadd.s32 1, %s24
      %s34 = scalar_select %p31, %s33, %s24
      %p35 = scmp.ge.s32.totalorder %s34, 2
      %s36 = scalar_select %p35, 0, %s34
      %s37 = ssub.s32 %s25, %s32
      %p38 = scmp.eq.s32.totalorder %s37, 0
      %s40 = sadd.s32 %s39, 1
      %s41 = scalar_select %p38, %s39, %s40
      %p44 = pneg %p38
      %p45 = scmp.eq.s32.totalorder %s17, 1
      %p46 = por %p44, %p45
      %p47 = scmp.ne.s32.totalorder %s39, %s42
      %p48 = scmp.eq.s32.totalorder %s17, 0
      %p49 = por %p47, %p48
      %p50 = scmp.ne.s32.totalorder %s39, %s42
      %p51 = scmp.eq.s32.totalorder %s22, 1
      %p52 = por %p50, %p51
      %p53 = scmp.ne.s32.totalorder %s42, %s43
      %p54 = scmp.eq.s32.totalorder %s22, 0
      %p55 = por %p53, %p54
      %p56 = scmp.ne.s32.totalorder %s42, %s43
      %p57 = scmp.eq.s32.totalorder %s23, 1
      %p58 = por %p56, %p57
      %p60 = scmp.ne.s32.totalorder %s43, %s59
      %p61 = scmp.eq.s32.totalorder %s23, 0
      %p62 = por %p60, %p61
      %s63 = ssub.s32 %s24, %s36
      %p64 = scmp.eq.s32.totalorder %s63, 0
      %s66 = sadd.s32 %s65, 1
      %s67 = scalar_select %p64, %s65, %s66
      %p70 = pneg %p64
      %p71 = scmp.eq.s32.totalorder %s17, 1
      %p72 = por %p70, %p71
      %p73 = scmp.ne.s32.totalorder %s65, %s68
      %p74 = scmp.eq.s32.totalorder %s17, 0
      %p75 = por %p73, %p74
      %p76 = scmp.ne.s32.totalorder %s65, %s68
      %p77 = scmp.eq.s32.totalorder %s22, 1
      %p78 = por %p76, %p77
      %p79 = scmp.ne.s32.totalorder %s68, %s69
      %p80 = scmp.eq.s32.totalorder %s22, 0
      %p81 = por %p79, %p80
      %p82 = scmp.ne.s32.totalorder %s68, %s69
      %p83 = scmp.eq.s32.totalorder %s23, 1
      %p84 = por %p82, %p83
      %p86 = scmp.ne.s32.totalorder %s69, %s85
      %p87 = scmp.eq.s32.totalorder %s23, 0
      %p88 = por %p86, %p87
      %s90 = sadd.s32 %s89, 1
      %p93 = scmp.eq.s32.totalorder %s17, 1
      %p94 = scmp.ne.s32.totalorder %s89, %s91
      %p95 = scmp.eq.s32.totalorder %s17, 0
      %p96 = por %p94, %p95
      %p97 = scmp.ne.s32.totalorder %s89, %s91
      %p98 = scmp.eq.s32.totalorder %s22, 1
      %p99 = por %p97, %p98
      %p100 = scmp.ne.s32.totalorder %s91, %s92
      %p101 = scmp.eq.s32.totalorder %s22, 0
      %p102 = por %p100, %p101
      %p103 = scmp.ne.s32.totalorder %s91, %s92
      %p104 = scmp.eq.s32.totalorder %s23, 1
      %p105 = por %p103, %p104
      %p107 = scmp.ne.s32.totalorder %s92, %s106
      %p108 = scmp.eq.s32.totalorder %s23, 0
      %p109 = por %p107, %p108
      %s111 = sadd.s32 %s110, 1
      %p114 = scmp.eq.s32.totalorder %s17, 1
      %p115 = scmp.ne.s32.totalorder %s110, %s112
      %p116 = scmp.eq.s32.totalorder %s17, 0
      %p117 = por %p115, %p116
      %p118 = scmp.ne.s32.totalorder %s110, %s112
      %p119 = scmp.eq.s32.totalorder %s22, 1
      %p120 = por %p118, %p119
      %p121 = scmp.ne.s32.totalorder %s112, %s113
      %p122 = scmp.eq.s32.totalorder %s22, 0
      %p123 = por %p121, %p122
      %p124 = scmp.ne.s32.totalorder %s112, %s113
      %p125 = scmp.eq.s32.totalorder %s23, 1
      %p126 = por %p124, %p125
      %p128 = scmp.ne.s32.totalorder %s113, %s127
      %p129 = scmp.eq.s32.totalorder %s23, 0
      %p130 = por %p128, %p129
      %s131 = ssub.s32 %s24, %s36
      %s132 = ssub.s32 %s25, %s32
      %s133 = sor.u32 %s131, %s132
      %p134 = scmp.eq.s32.totalorder %s133, 0
      %s136 = sadd.s32 %s135, 1
      %s137 = scalar_select %p134, %s135, %s136
      %p140 = pneg %p134
      %p141 = scmp.eq.s32.totalorder %s17, 1
      %p142 = por %p140, %p141
      %p143 = scmp.ne.s32.totalorder %s135, %s138
      %p144 = scmp.eq.s32.totalorder %s17, 0
      %p145 = por %p143, %p144
      %p146 = scmp.ne.s32.totalorder %s135, %s138
      %p147 = scmp.eq.s32.totalorder %s22, 1
      %p148 = por %p146, %p147
      %p149 = scmp.ne.s32.totalorder %s138, %s139
      %p150 = scmp.eq.s32.totalorder %s22, 0
      %p151 = por %p149, %p150
      %p152 = scmp.ne.s32.totalorder %s138, %s139
      %p153 = scmp.eq.s32.totalorder %s23, 1
      %p154 = por %p152, %p153
      %p156 = scmp.ne.s32.totalorder %s139, %s155
      %p157 = scmp.eq.s32.totalorder %s23, 0
      %p158 = por %p156, %p157
      %s159 = ssub.s32 %s24, %s36
      %p160 = scmp.eq.s32.totalorder %s159, 0
      %s162 = sadd.s32 %s161, 1
      %s163 = scalar_select %p160, %s161, %s162
      %p166 = pneg %p160
      %p167 = scmp.eq.s32.totalorder %s17, 1
      %p168 = por %p166, %p167
      %p169 = scmp.ne.s32.totalorder %s161, %s164
      %p170 = scmp.eq.s32.totalorder %s17, 0
      %p171 = por %p169, %p170
      %p172 = scmp.ne.s32.totalorder %s161, %s164
      %p173 = scmp.eq.s32.totalorder %s22, 1
      %p174 = por %p172, %p173
      %p175 = scmp.ne.s32.totalorder %s164, %s165
      %p176 = scmp.eq.s32.totalorder %s22, 0
      %p177 = por %p175, %p176
      %p178 = scmp.ne.s32.totalorder %s164, %s165
      %p179 = scmp.eq.s32.totalorder %s23, 1
      %p180 = por %p178, %p179
      %p182 = scmp.ne.s32.totalorder %s165, %s181
      %p183 = scmp.eq.s32.totalorder %s23, 0
      %p184 = por %p182, %p183
      %s186 = sadd.s32 %s185, 1
      %p189 = scmp.eq.s32.totalorder %s17, 1
      %p190 = scmp.ne.s32.totalorder %s185, %s187
      %p191 = scmp.eq.s32.totalorder %s17, 0
      %p192 = por %p190, %p191
      %p193 = scmp.ne.s32.totalorder %s185, %s187
      %p194 = scmp.eq.s32.totalorder %s22, 1
      %p195 = por %p193, %p194
      %p196 = scmp.ne.s32.totalorder %s187, %s188
      %p197 = scmp.eq.s32.totalorder %s22, 0
      %p198 = por %p196, %p197
      %p199 = scmp.ne.s32.totalorder %s187, %s188
      %p200 = scmp.eq.s32.totalorder %s23, 1
      %p201 = por %p199, %p200
      %p203 = scmp.ne.s32.totalorder %s188, %s202
      %p204 = scmp.eq.s32.totalorder %s23, 0
      %p205 = por %p203, %p204
      %s207 = sadd.s32 %s206, 1
      %p210 = scmp.eq.s32.totalorder %s17, 1
      %p211 = scmp.ne.s32.totalorder %s206, %s208
      %p212 = scmp.eq.s32.totalorder %s17, 0
      %p213 = por %p211, %p212
      %p214 = scmp.ne.s32.totalorder %s206, %s208
      %p215 = scmp.eq.s32.totalorder %s22, 1
      %p216 = por %p214, %p215
      %p217 = scmp.ne.s32.totalorder %s208, %s209
      %p218 = scmp.eq.s32.totalorder %s22, 0
      %p219 = por %p217, %p218
      %p220 = scmp.ne.s32.totalorder %s208, %s209
      %p221 = scmp.eq.s32.totalorder %s23, 1
      %p222 = por %p220, %p221
      %p224 = scmp.ne.s32.totalorder %s209, %s223
      %p225 = scmp.eq.s32.totalorder %s23, 0
      %p226 = por %p224, %p225
      %s227 = ssub.s32 %s24, %s36
      %p228 = scmp.eq.s32.totalorder %s227, 0
      %s230 = sadd.s32 %s229, 1
      %s231 = scalar_select %p228, %s229, %s230
      %p234 = pneg %p228
      %p235 = scmp.eq.s32.totalorder %s17, 1
      %p236 = por %p234, %p235
      %p237 = scmp.ne.s32.totalorder %s229, %s232
      %p238 = scmp.eq.s32.totalorder %s17, 0
      %p239 = por %p237, %p238
      %p240 = scmp.ne.s32.totalorder %s229, %s232
      %p241 = scmp.eq.s32.totalorder %s22, 1
      %p242 = por %p240, %p241
      %p243 = scmp.ne.s32.totalorder %s232, %s233
      %p244 = scmp.eq.s32.totalorder %s22, 0
      %p245 = por %p243, %p244
      %p246 = scmp.ne.s32.totalorder %s232, %s233
      %p247 = scmp.eq.s32.totalorder %s23, 1
      %p248 = por %p246, %p247
      %p250 = scmp.ne.s32.totalorder %s233, %s249
      %p251 = scmp.eq.s32.totalorder %s23, 0
      %p252 = por %p250, %p251
      %p253 = scmp.le.s32.totalorder 1, %s17
      %p254 = scmp.lt.s32.totalorder %s17, 3
      %p255 = pnand %p253, %p254
      %p256 = pneg %p255
      // Predicated region
      $region9: #{tpu_custom_call.1} parent=5 // pred_check
        _
      $region10: #{tpu_custom_call.1} parent=5 // pred_check_branch
        %258 = sbr.rel (%p255) target = $region12
      $region11: #{tpu_custom_call.1} parent=5 // pred_region
        %s259 = ssub.s32 %s17, 1
        // Predicated region
        $region13: #{tpu_custom_call.1} parent=11 // pred_check
          %p260 = pneg %p55
        $region14: #{tpu_custom_call.1} parent=11 // pred_check_branch
          %262 = sbr.rel (%p260) target = $region16
        $region15: #{tpu_custom_call.1} parent=11 // pred_region
          %s263 = smul.u32 32, %s27
          %p264 = scmp.lt.s32.totalorder %s263, 31
          %s265 = scalar_select %p264, %s263, 31
          %s266 = smul.addr %s265, 4
          %s267 = scalar_lea.vmem %s0, %s266
          %s268 = smul.u32 32, %s27
        $region16: #{tpu_custom_call.1} parent=11 // pred_fallthru
          _
        // Predicated region
        $region17: #{tpu_custom_call.1} parent=11 // pred_check
          %p269 = pneg %p102
        $region18: #{tpu_custom_call.1} parent=11 // pred_check_branch
          %271 = sbr.rel (%p269) target = $region20
        $region19: #{tpu_custom_call.1} parent=11 // pred_region
          _
        $region20: #{tpu_custom_call.1} parent=11 // pred_fallthru
          _
        // Predicated region
        $region21: #{tpu_custom_call.1} parent=11 // pred_check
          %p272 = pneg %p123
        $region22: #{tpu_custom_call.1} parent=11 // pred_check_branch
          %274 = sbr.rel (%p272) target = $region24
        $region23: #{tpu_custom_call.1} parent=11 // pred_region
          _
        $region24: #{tpu_custom_call.1} parent=11 // pred_fallthru
          _
        // Predicated region
        $region25: #{tpu_custom_call.1} parent=11 // pred_check
          %p275 = pneg %p198
        $region26: #{tpu_custom_call.1} parent=11 // pred_check_branch
          %277 = sbr.rel (%p275) target = $region28
        $region27: #{tpu_custom_call.1} parent=11 // pred_region
          _
        $region28: #{tpu_custom_call.1} parent=11 // pred_fallthru
          _
        // Predicated region
        $region29: #{tpu_custom_call.1} parent=11 // pred_check
          %p278 = pneg %p219
        $region30: #{tpu_custom_call.1} parent=11 // pred_check_branch
          %280 = sbr.rel (%p278) target = $region32
        $region31: #{tpu_custom_call.1} parent=11 // pred_region
          _
        $region32: #{tpu_custom_call.1} parent=11 // pred_fallthru
          _
      $region12: #{tpu_custom_call.1} parent=5 // pred_fallthru
        _
      %p281 = scmp.lt.s32.totalorder %s17, 2
      // Predicated region
      $region33: #{tpu_custom_call.1} parent=5 // pred_check
        %p282 = pneg %p281
      $region34: #{tpu_custom_call.1} parent=5 // pred_check_branch
        %284 = sbr.rel (%p282) target = $region36
      $region35: #{tpu_custom_call.1} parent=5 // pred_region
        // Predicated region
        $region37: #{tpu_custom_call.1} parent=35 // pred_check
          %p285 = pneg %p75
        $region38: #{tpu_custom_call.1} parent=35 // pred_check_branch
          %287 = sbr.rel (%p285) target = $region40
        $region39: #{tpu_custom_call.1} parent=35 // pred_region
          %s288 = smul.u32 16, %s24
          %p289 = scmp.lt.s32.totalorder %s288, 31
          %s290 = scalar_select %p289, %s288, 31
          %s291 = smul.addr %s290, 4
          %s292 = scalar_lea.vmem %s1, %s291
          %s293 = smul.u32 16, %s24
        $region40: #{tpu_custom_call.1} parent=35 // pred_fallthru
          _
        // Predicated region
        $region41: #{tpu_custom_call.1} parent=35 // pred_check
          %p294 = pneg %p145
        $region42: #{tpu_custom_call.1} parent=35 // pred_check_branch
          %296 = sbr.rel (%p294) target = $region44
        $region43: #{tpu_custom_call.1} parent=35 // pred_region
          %s297 = smul.u32 4, %s24
          %s298 = smul.u32 2, %s25
          %p299 = scmp.lt.s32.totalorder %s297, 7
          %s300 = scalar_select %p299, %s297, 7
          %p301 = scmp.lt.s32.totalorder %s298, 1
          %s302 = scalar_select %p301, %s298, 1
          %s303 = smul.addr %s300, 2
          %s304 = sadd.s32 %s302, %s303
          %s305 = smul.addr %s304, 8
          %s306 = scalar_lea.vmem %s4, %s305
          %s307 = smul.u32 4, %s24
          %s308 = smul.u32 2, %s25
        $region44: #{tpu_custom_call.1} parent=35 // pred_fallthru
          _
        // Predicated region
        $region45: #{tpu_custom_call.1} parent=35 // pred_check
          %p309 = pneg %p171
        $region46: #{tpu_custom_call.1} parent=35 // pred_check_branch
          %311 = sbr.rel (%p309) target = $region48
        $region47: #{tpu_custom_call.1} parent=35 // pred_region
          %s312 = smul.u32 16, %s24
          %p313 = scmp.lt.s32.totalorder %s312, 31
          %s314 = scalar_select %p313, %s312, 31
          %s315 = smul.addr %s314, 4
          %s316 = scalar_lea.vmem %s5, %s315
          %s317 = smul.u32 16, %s24
        $region48: #{tpu_custom_call.1} parent=35 // pred_fallthru
          _
      $region36: #{tpu_custom_call.1} parent=5 // pred_fallthru
        _
      %p318 = scmp.le.s32.totalorder 1, %s17
      %p319 = scmp.lt.s32.totalorder %s17, 3
      %p320 = pnand %p318, %p319
      %p321 = pneg %p320
      // Predicated region
      $region49: #{tpu_custom_call.1} parent=5 // pred_check
        _
      $region50: #{tpu_custom_call.1} parent=5 // pred_check_branch
        %323 = sbr.rel (%p320) target = $region52
      $region51: #{tpu_custom_call.1} parent=5 // pred_region
        %s324 = ssub.s32 %s17, 1
        %s325 = smul.u32 32, %s27
        %p326 = scmp.lt.s32.totalorder %s325, 31
        %s327 = scalar_select %p326, %s325, 31
        %s328 = smul.addr %s327, 4
        %s329 = scalar_lea.vmem %s0, %s328
        %p330 = pneg %p55
        %p331 = pneg %p52
        %s332 = smul.u32 16, %s26
        %p333 = scmp.lt.s32.totalorder %s332, 31
        %s334 = scalar_select %p333, %s332, 31
        %s335 = smul.addr %s334, 4
        %s336 = scalar_lea.vmem %s1, %s335
        %p337 = pneg %p81
        %p338 = pneg %p78
        %p339 = pneg %p102
        %p340 = pneg %p99
        %p341 = pneg %p123
        %p342 = pneg %p120
        %s343 = smul.u32 4, %s26
        %s344 = smul.u32 2, %s27
        %p345 = scmp.lt.s32.totalorder %s343, 7
        %s346 = scalar_select %p345, %s343, 7
        %p347 = scmp.lt.s32.totalorder %s344, 1
        %s348 = scalar_select %p347, %s344, 1
        %s349 = smul.addr %s346, 2
        %s350 = sadd.s32 %s348, %s349
        %s351 = smul.addr %s350, 8
        %s352 = scalar_lea.vmem %s4, %s351
        %p353 = pneg %p151
        %p354 = pneg %p148
        %s355 = smul.u32 16, %s26
        %p356 = scmp.lt.s32.totalorder %s355, 31
        %s357 = scalar_select %p356, %s355, 31
        %s358 = smul.addr %s357, 4
        %s359 = scalar_lea.vmem %s5, %s358
        %p360 = pneg %p177
        %p361 = pneg %p174
        %p362 = pneg %p198
        %p363 = pneg %p195
        %p364 = pneg %p219
        %p365 = pneg %p216
        %p366 = pneg %p245
        %p367 = pneg %p242
        %s368 = sand.u32 %s232, 1
        %s369 = scalar_lea.sflag [#allocation5], %s368
        %s370 = sand.u32 %s232, 1
        %s371 = smul.addr %s370, 128
        %s372 = scalar_lea.vmem [#allocation4], %s371
        %s373 = smul.u32 32, %s27
        %p374 = scmp.lt.s32.totalorder %s373, 31
        %s375 = scalar_select %p374, %s373, 31
        %s376 = smul.addr %s375, 4
        %s377 = scalar_lea.vmem %s0, %s376
        %s378 = smul.u32 32, %s27
        %s379 = smul.u32 16, %s26
        %p380 = scmp.lt.s32.totalorder %s379, 31
        %s381 = scalar_select %p380, %s379, 31
        %s382 = smul.addr %s381, 4
        %s383 = scalar_lea.vmem %s1, %s382
        %s384 = smul.u32 16, %s26
        %s385 = smul.u32 4, %s26
        %s386 = smul.u32 2, %s27
        %p387 = scmp.lt.s32.totalorder %s385, 7
        %s388 = scalar_select %p387, %s385, 7
        %p389 = scmp.lt.s32.totalorder %s386, 1
        %s390 = scalar_select %p389, %s386, 1
        %s391 = smul.addr %s388, 2
        %s392 = sadd.s32 %s390, %s391
        %s393 = smul.addr %s392, 8
        %s394 = scalar_lea.vmem %s4, %s393
        %s395 = smul.u32 4, %s26
        %s396 = smul.u32 2, %s27
        %s397 = smul.u32 16, %s26
        %p398 = scmp.lt.s32.totalorder %s397, 31
        %s399 = scalar_select %p398, %s397, 31
        %s400 = smul.addr %s399, 4
        %s401 = scalar_lea.vmem %s5, %s400
        %s402 = smul.u32 16, %s26
        %s403 = smul.u32 16, %s26
        %p405 = scmp.eq.s32.totalorder %s27, 0
        // Predicated region
        $region53: #{tpu_custom_call.1} parent=51 // pred_check
          %p406 = pneg %p405
        $region54: #{tpu_custom_call.1} parent=51 // pred_check_branch
          %408 = sbr.rel (%p406) target = $region56
        $region55: #{tpu_custom_call.1} parent=51 // pred_region
          %409 = vst [vmem:[#allocation2] sm:$0xff] 0.0
          %410 = vst [vmem:[#allocation2 + $0x8] sm:$0xff] 0.0
          %411 = vst [vmem:[#allocation2 + $0x10] sm:$0xff] 0.0
          %412 = vst [vmem:[#allocation2 + $0x18] sm:$0xff] 0.0
          %413 = vst [vmem:[#allocation2 + $0x20] sm:$0xff] 0.0
          %414 = vst [vmem:[#allocation2 + $0x28] sm:$0xff] 0.0
          %415 = vst [vmem:[#allocation2 + $0x30] sm:$0xff] 0.0
          %416 = vst [vmem:[#allocation2 + $0x38] sm:$0xff] 0.0
          %417 = vst [vmem:[#allocation2 + $0x40] sm:$0xff] 0.0
          %418 = vst [vmem:[#allocation2 + $0x48] sm:$0xff] 0.0
          %419 = vst [vmem:[#allocation2 + $0x50] sm:$0xff] 0.0
          %420 = vst [vmem:[#allocation2 + $0x58] sm:$0xff] 0.0
          %421 = vst [vmem:[#allocation2 + $0x60] sm:$0xff] 0.0
          %422 = vst [vmem:[#allocation2 + $0x68] sm:$0xff] 0.0
          %423 = vst [vmem:[#allocation2 + $0x70] sm:$0xff] 0.0
          %424 = vst [vmem:[#allocation2 + $0x78] sm:$0xff] 0.0
        $region56: #{tpu_custom_call.1} parent=51 // pred_fallthru
          _
        %v425 = vld [vmem:[%s377] sm:$0xf]
        %v426 = vld [vmem:[%s377 + $0x4] sm:$0xf]
        %v427 = vld [vmem:[%s377 + $0x8] sm:$0xf]
        %v428 = vld [vmem:[%s377 + $0xc] sm:$0xf]
        %v429 = vld [vmem:[%s377 + $0x10] sm:$0xf]
        %v430 = vld [vmem:[%s377 + $0x14] sm:$0xf]
        %v431 = vld [vmem:[%s377 + $0x18] sm:$0xf]
        %v432 = vld [vmem:[%s377 + $0x1c] sm:$0xf]
        %v433 = vld [vmem:[%s377 + $0x20] sm:$0xf]
        %v434 = vld [vmem:[%s377 + $0x24] sm:$0xf]
        %v435 = vld [vmem:[%s377 + $0x28] sm:$0xf]
        %v436 = vld [vmem:[%s377 + $0x2c] sm:$0xf]
        %v437 = vld [vmem:[%s377 + $0x30] sm:$0xf]
        %v438 = vld [vmem:[%s377 + $0x34] sm:$0xf]
        %v439 = vld [vmem:[%s377 + $0x38] sm:$0xf]
        %v440 = vld [vmem:[%s377 + $0x3c] sm:$0xf]
        %v441 = vld [vmem:[%s377 + $0x40] sm:$0xf]
        %v442 = vld [vmem:[%s377 + $0x44] sm:$0xf]
        %v443 = vld [vmem:[%s377 + $0x48] sm:$0xf]
        %v444 = vld [vmem:[%s377 + $0x4c] sm:$0xf]
        %v445 = vld [vmem:[%s377 + $0x50] sm:$0xf]
        %v446 = vld [vmem:[%s377 + $0x54] sm:$0xf]
        %v447 = vld [vmem:[%s377 + $0x58] sm:$0xf]
        %v448 = vld [vmem:[%s377 + $0x5c] sm:$0xf]
        %v449 = vld [vmem:[%s377 + $0x60] sm:$0xf]
        %v450 = vld [vmem:[%s377 + $0x64] sm:$0xf]
        %v451 = vld [vmem:[%s377 + $0x68] sm:$0xf]
        %v452 = vld [vmem:[%s377 + $0x6c] sm:$0xf]
        %v453 = vld [vmem:[%s377 + $0x70] sm:$0xf]
        %v454 = vld [vmem:[%s377 + $0x74] sm:$0xf]
        %v455 = vld [vmem:[%s377 + $0x78] sm:$0xf]
        %v456 = vld [vmem:[%s377 + $0x7c] sm:$0xf]
        %v457 = vld [vmem:[%s2] sm:$0xf]
        %v458 = vld [vmem:[%s2 + $0x4] sm:$0xf]
        %v459 = vld [vmem:[%s2 + $0x8] sm:$0xf]
        %v460 = vld [vmem:[%s2 + $0xc] sm:$0x1]
        %v493 = vunpack.c.l.b16 %v425
        %v494 = vunpack.c.l.b16 %v426
        %v495 = vunpack.c.l.b16 %v427
        %v496 = vunpack.c.l.b16 %v428
        %v497 = vunpack.c.l.b16 %v429
        %v498 = vunpack.c.l.b16 %v430
        %v499 = vunpack.c.l.b16 %v431
        %v500 = vunpack.c.l.b16 %v432
        %v501 = vunpack.c.l.b16 %v433
        %v502 = vunpack.c.l.b16 %v434
        %v503 = vunpack.c.l.b16 %v435
        %v504 = vunpack.c.l.b16 %v436
        %v505 = vunpack.c.l.b16 %v437
        %v506 = vunpack.c.l.b16 %v438
        %v507 = vunpack.c.l.b16 %v439
        %v508 = vunpack.c.l.b16 %v440
        %v509 = vunpack.c.l.b16 %v441
        %v510 = vunpack.c.l.b16 %v442
        %v511 = vunpack.c.l.b16 %v443
        %v512 = vunpack.c.l.b16 %v444
        %v513 = vunpack.c.l.b16 %v445
        %v514 = vunpack.c.l.b16 %v446
        %v515 = vunpack.c.l.b16 %v447
        %v516 = vunpack.c.l.b16 %v448
        %v517 = vunpack.c.l.b16 %v449
        %v518 = vunpack.c.l.b16 %v450
        %v519 = vunpack.c.l.b16 %v451
        %v520 = vunpack.c.l.b16 %v452
        %v521 = vunpack.c.l.b16 %v453
        %v522 = vunpack.c.l.b16 %v454
        %v523 = vunpack.c.l.b16 %v455
        %v524 = vunpack.c.l.b16 %v456
        %v525 = vpack.c.b16 %v494, %v493
        %v526 = vpack.c.b16 %v496, %v495
        %v527 = vpack.c.b16 %v498, %v497
        %v528 = vpack.c.b16 %v500, %v499
        %v529 = vpack.c.b16 %v502, %v501
        %v530 = vpack.c.b16 %v504, %v503
        %v531 = vpack.c.b16 %v506, %v505
        %v532 = vpack.c.b16 %v508, %v507
        %v533 = vpack.c.b16 %v510, %v509
        %v534 = vpack.c.b16 %v512, %v511
        %v535 = vpack.c.b16 %v514, %v513
        %v536 = vpack.c.b16 %v516, %v515
        %v537 = vpack.c.b16 %v518, %v517
        %v538 = vpack.c.b16 %v520, %v519
        %v539 = vpack.c.b16 %v522, %v521
        %v540 = vpack.c.b16 %v524, %v523
        %v545 = vunpack.c.l.b16 %v457
        %v546 = vunpack.c.l.b16 %v458
        %v547 = vunpack.c.l.b16 %v459
        %v548 = vunpack.c.l.b16 %v460
        %v549 = vpack.c.b16 %v546, %v545
        %v550 = vpack.c.b16 %v548, %v547
        %vm552 = vcmask 203776
        %v554 = vsel %vm552, %v525, 0
        %v557 = vsel %vm552, %v526, 0
        %v560 = vsel %vm552, %v527, 0
        %v563 = vsel %vm552, %v528, 0
        %v566 = vsel %vm552, %v529, 0
        %v569 = vsel %vm552, %v530, 0
        %v572 = vsel %vm552, %v531, 0
        %v575 = vsel %vm552, %v532, 0
        %v578 = vsel %vm552, %v533, 0
        %v581 = vsel %vm552, %v534, 0
        %v584 = vsel %vm552, %v535, 0
        %v587 = vsel %vm552, %v536, 0
        %v590 = vsel %vm552, %v537, 0
        %v593 = vsel %vm552, %v538, 0
        %v596 = vsel %vm552, %v539, 0
        %v599 = vsel %vm552, %v540, 0
        %vm601 = vcmask 1043456
        %vm602 = vcmask 1044480
        %v603 = vsel %vm601, 4294967295, 65535
        %v604 = vsel %vm602, %v603, 0
        %v606 = vand.u32 %v550, %v604
        %608 = vmatprep.subr.bf16.mxu0 0
        %609 = vmatpush1.bf16.msra.mxu0 %v549
        %610 = vmatprep.subr.bf16.mxu0 0
        %611 = vmatpush1.bf16.msra.mxu0 %v606
        %612 = vmatprep.subr.bf16.mxu0 0
        %613 = vmatpush1.bf16.msra.mxu0 0
        %614 = vmatprep.subr.bf16.mxu0 0
        %615 = vmatpush1.bf16.msra.mxu0 0
        %616 = vmatprep.subr.bf16.mxu0 0
        %617 = vmatpush1.bf16.msra.mxu0 0
        %618 = vmatprep.subr.bf16.mxu0 0
        %619 = vmatpush1.bf16.msra.mxu0 0
        %620 = vmatprep.subr.bf16.mxu0 0
        %621 = vmatpush1.bf16.msra.mxu0 0
        %622 = vmatprep.subr.bf16.mxu0 0
        %623 = vmatpush1.bf16.msra.mxu0 0
        %624 = vmatprep.subr.bf16.mxu0 0
        %625 = vmatpush1.bf16.msra.mxu0 0
        %626 = vmatprep.subr.bf16.mxu0 0
        %627 = vmatpush1.bf16.msra.mxu0 0
        %628 = vmatprep.subr.bf16.mxu0 0
        %629 = vmatpush1.bf16.msra.mxu0 0
        %630 = vmatprep.subr.bf16.mxu0 0
        %631 = vmatpush1.bf16.msra.mxu0 0
        %632 = vmatprep.subr.bf16.mxu0 0
        %633 = vmatpush1.bf16.msra.mxu0 0
        %634 = vmatprep.subr.bf16.mxu0 0
        %635 = vmatpush1.bf16.msra.mxu0 0
        %636 = vmatprep.subr.bf16.mxu0 0
        %637 = vmatpush1.bf16.msra.mxu0 0
        %638 = vmatprep.subr.bf16.mxu0 0
        %639 = vmatpush1.bf16.msra.mxu0 0
        %640 = vmatprep.mubr.bf16.mxu0 0
        %641 = vmatmul.mubr.bf16.gmra.mrb[0].mxu0 %v554
        %v642 = vpop.f32.mrb[0].mxu0
        %v643 = vadd.f32 0.0, %v642
        %v644 = vpop.f32.mrb[0].mxu0
        %v645 = vpop.f32.mrb[0].mxu0
        %v646 = vadd.f32 0.0, %v645
        %v647 = vpop.f32.mrb[0].mxu0
        %648 = vmatprep.mubr.bf16.mxu0 0
        %649 = vmatmul.mubr.bf16.gmra.mrb[0].mxu0 %v557
        %v650 = vpop.f32.mrb[0].mxu0
        %v651 = vadd.f32 0.0, %v650
        %v652 = vpop.f32.mrb[0].mxu0
        %v653 = vpop.f32.mrb[0].mxu0
        %v654 = vadd.f32 0.0, %v653
        %v655 = vpop.f32.mrb[0].mxu0
        %656 = vmatprep.mubr.bf16.mxu0 0
        %657 = vmatmul.mubr.bf16.gmra.mrb[0].mxu0 %v560
        %v658 = vpop.f32.mrb[0].mxu0
        %v659 = vadd.f32 0.0, %v658
        %v660 = vpop.f32.mrb[0].mxu0
        %v661 = vpop.f32.mrb[0].mxu0
        %v662 = vadd.f32 0.0, %v661
        %v663 = vpop.f32.mrb[0].mxu0
        %664 = vmatprep.mubr.bf16.mxu0 0
        %665 = vmatmul.mubr.bf16.gmra.mrb[0].mxu0 %v563
        %v666 = vpop.f32.mrb[0].mxu0
        %v667 = vadd.f32 0.0, %v666
        %v668 = vpop.f32.mrb[0].mxu0
        %v669 = vpop.f32.mrb[0].mxu0
        %v670 = vadd.f32 0.0, %v669
        %v671 = vpop.f32.mrb[0].mxu0
        %672 = vmatprep.mubr.bf16.mxu0 0
        %673 = vmatmul.mubr.bf16.gmra.mrb[0].mxu0 %v566
        %v674 = vpop.f32.mrb[0].mxu0
        %v675 = vadd.f32 0.0, %v674
        %v676 = vpop.f32.mrb[0].mxu0
        %v677 = vpop.f32.mrb[0].mxu0
        %v678 = vadd.f32 0.0, %v677
        %v679 = vpop.f32.mrb[0].mxu0
        %680 = vmatprep.mubr.bf16.mxu0 0
        %681 = vmatmul.mubr.bf16.gmra.mrb[0].mxu0 %v569
        %v682 = vpop.f32.mrb[0].mxu0
        %v683 = vadd.f32 0.0, %v682
        %v684 = vpop.f32.mrb[0].mxu0
        %v685 = vpop.f32.mrb[0].mxu0
        %v686 = vadd.f32 0.0, %v685
        %v687 = vpop.f32.mrb[0].mxu0
        %688 = vmatprep.mubr.bf16.mxu0 0
        %689 = vmatmul.mubr.bf16.gmra.mrb[0].mxu0 %v572
        %v690 = vpop.f32.mrb[0].mxu0
        %v691 = vadd.f32 0.0, %v690
        %v692 = vpop.f32.mrb[0].mxu0
        %v693 = vpop.f32.mrb[0].mxu0
        %v694 = vadd.f32 0.0, %v693
        %v695 = vpop.f32.mrb[0].mxu0
        %696 = vmatprep.mubr.bf16.mxu0 0
        %697 = vmatmul.mubr.bf16.gmra.mrb[0].mxu0 %v575
        %v698 = vpop.f32.mrb[0].mxu0
        %v699 = vadd.f32 0.0, %v698
        %v700 = vpop.f32.mrb[0].mxu0
        %v701 = vpop.f32.mrb[0].mxu0
        %v702 = vadd.f32 0.0, %v701
        %v703 = vpop.f32.mrb[0].mxu0
        %704 = vmatprep.mubr.bf16.mxu0 0
        %705 = vmatmul.mubr.bf16.gmra.mrb[0].mxu0 %v578
        %v706 = vpop.f32.mrb[0].mxu0
        %v707 = vadd.f32 0.0, %v706
        %v708 = vpop.f32.mrb[0].mxu0
        %v709 = vpop.f32.mrb[0].mxu0
        %v710 = vadd.f32 0.0, %v709
        %v711 = vpop.f32.mrb[0].mxu0
        %712 = vmatprep.mubr.bf16.mxu0 0
        %713 = vmatmul.mubr.bf16.gmra.mrb[0].mxu0 %v581
        %v714 = vpop.f32.mrb[0].mxu0
        %v715 = vadd.f32 0.0, %v714
        %v716 = vpop.f32.mrb[0].mxu0
        %v717 = vpop.f32.mrb[0].mxu0
        %v718 = vadd.f32 0.0, %v717
        %v719 = vpop.f32.mrb[0].mxu0
        %720 = vmatprep.mubr.bf16.mxu0 0
        %721 = vmatmul.mubr.bf16.gmra.mrb[0].mxu0 %v584
        %v722 = vpop.f32.mrb[0].mxu0
        %v723 = vadd.f32 0.0, %v722
        %v724 = vpop.f32.mrb[0].mxu0
        %v725 = vpop.f32.mrb[0].mxu0
        %v726 = vadd.f32 0.0, %v725
        %v727 = vpop.f32.mrb[0].mxu0
        %728 = vmatprep.mubr.bf16.mxu0 0
        %729 = vmatmul.mubr.bf16.gmra.mrb[0].mxu0 %v587
        %v730 = vpop.f32.mrb[0].mxu0
        %v731 = vadd.f32 0.0, %v730
        %v732 = vpop.f32.mrb[0].mxu0
        %v733 = vpop.f32.mrb[0].mxu0
        %v734 = vadd.f32 0.0, %v733
        %v735 = vpop.f32.mrb[0].mxu0
        %736 = vmatprep.mubr.bf16.mxu0 0
        %737 = vmatmul.mubr.bf16.gmra.mrb[0].mxu0 %v590
        %v738 = vpop.f32.mrb[0].mxu0
        %v739 = vadd.f32 0.0, %v738
        %v740 = vpop.f32.mrb[0].mxu0
        %v741 = vpop.f32.mrb[0].mxu0
        %v742 = vadd.f32 0.0, %v741
        %v743 = vpop.f32.mrb[0].mxu0
        %744 = vmatprep.mubr.bf16.mxu0 0
        %745 = vmatmul.mubr.bf16.gmra.mrb[0].mxu0 %v593
        %v746 = vpop.f32.mrb[0].mxu0
        %v747 = vadd.f32 0.0, %v746
        %v748 = vpop.f32.mrb[0].mxu0
        %v749 = vpop.f32.mrb[0].mxu0
        %v750 = vadd.f32 0.0, %v749
        %v751 = vpop.f32.mrb[0].mxu0
        %752 = vmatprep.mubr.bf16.mxu0 0
        %753 = vmatmul.mubr.bf16.gmra.mrb[0].mxu0 %v596
        %v754 = vpop.f32.mrb[0].mxu0
        %v755 = vadd.f32 0.0, %v754
        %v756 = vpop.f32.mrb[0].mxu0
        %v757 = vpop.f32.mrb[0].mxu0
        %v758 = vadd.f32 0.0, %v757
        %v759 = vpop.f32.mrb[0].mxu0
        %760 = vmatprep.mubr.bf16.mxu0 0
        %761 = vmatmul.mubr.bf16.gmra.mrb[0].mxu0 %v599
        %v762 = vpop.f32.mrb[0].mxu0
        %v763 = vadd.f32 0.0, %v762
        %v764 = vpop.f32.mrb[0].mxu0
        %v765 = vpop.f32.mrb[0].mxu0
        %v766 = vadd.f32 0.0, %v765
        %v767 = vpop.f32.mrb[0].mxu0
        %768 = vdwg.mxu0
        %v769 = vpack.c.bf16 %v646, %v643
        %v770 = vpack.c.bf16 %v654, %v651
        %v771 = vpack.c.bf16 %v662, %v659
        %v772 = vpack.c.bf16 %v670, %v667
        %v773 = vpack.c.bf16 %v678, %v675
        %v774 = vpack.c.bf16 %v686, %v683
        %v775 = vpack.c.bf16 %v694, %v691
        %v776 = vpack.c.bf16 %v702, %v699
        %v777 = vpack.c.bf16 %v710, %v707
        %v778 = vpack.c.bf16 %v718, %v715
        %v779 = vpack.c.bf16 %v726, %v723
        %v780 = vpack.c.bf16 %v734, %v731
        %v781 = vpack.c.bf16 %v742, %v739
        %v782 = vpack.c.bf16 %v750, %v747
        %v783 = vpack.c.bf16 %v758, %v755
        %v784 = vpack.c.bf16 %v766, %v763
        %v785 = vld [vmem:[%s394] sm:$0xff]
        %v786 = vld [vmem:[%s394 + $0x8] sm:$0xff]
        %v787 = vld [vmem:[%s394 + $0x10] sm:$0xff]
        %v788 = vld [vmem:[%s394 + $0x18] sm:$0xff]
        %v789 = vld [vmem:[%s394 + $0x20] sm:$0xff]
        %v790 = vld [vmem:[%s394 + $0x28] sm:$0xff]
        %v791 = vld [vmem:[%s394 + $0x30] sm:$0xff]
        %v792 = vld [vmem:[%s394 + $0x38] sm:$0xff]
        %v793 = vunpack.c.l.s8.bf16 %v785
        %v794 = vunpack.c.l.s8.bf16 %v786
        %v795 = vunpack.c.h.s8.bf16 %v785
        %v796 = vunpack.c.h.s8.bf16 %v786
        %v797 = vunpack.c.l.s8.bf16 %v787
        %v798 = vunpack.c.l.s8.bf16 %v788
        %v799 = vunpack.c.h.s8.bf16 %v787
        %v800 = vunpack.c.h.s8.bf16 %v788
        %v801 = vunpack.c.l.s8.bf16 %v789
        %v802 = vunpack.c.l.s8.bf16 %v790
        %v803 = vunpack.c.h.s8.bf16 %v789
        %v804 = vunpack.c.h.s8.bf16 %v790
        %v805 = vunpack.c.l.s8.bf16 %v791
        %v806 = vunpack.c.l.s8.bf16 %v792
        %v807 = vunpack.c.h.s8.bf16 %v791
        %v808 = vunpack.c.h.s8.bf16 %v792
        %v809 = vld [vmem:[#allocation2] sm:$0xff]
        %v810 = vld [vmem:[#allocation2 + $0x8] sm:$0xff]
        %v811 = vld [vmem:[#allocation2 + $0x10] sm:$0xff]
        %v812 = vld [vmem:[#allocation2 + $0x18] sm:$0xff]
        %v813 = vld [vmem:[#allocation2 + $0x20] sm:$0xff]
        %v814 = vld [vmem:[#allocation2 + $0x28] sm:$0xff]
        %v815 = vld [vmem:[#allocation2 + $0x30] sm:$0xff]
        %v816 = vld [vmem:[#allocation2 + $0x38] sm:$0xff]
        %v817 = vld [vmem:[#allocation2 + $0x40] sm:$0xff]
        %v818 = vld [vmem:[#allocation2 + $0x48] sm:$0xff]
        %v819 = vld [vmem:[#allocation2 + $0x50] sm:$0xff]
        %v820 = vld [vmem:[#allocation2 + $0x58] sm:$0xff]
        %v821 = vld [vmem:[#allocation2 + $0x60] sm:$0xff]
        %v822 = vld [vmem:[#allocation2 + $0x68] sm:$0xff]
        %v823 = vld [vmem:[#allocation2 + $0x70] sm:$0xff]
        %v824 = vld [vmem:[#allocation2 + $0x78] sm:$0xff]
        %825 = vmatprep.subr.bf16.mxu0 0
        %826 = vmatpush1.bf16.msra.mxu0 %v769
        %827 = vmatprep.subr.bf16.mxu0 0
        %828 = vmatpush1.bf16.msra.mxu0 %v770
        %829 = vmatprep.subr.bf16.mxu0 0
        %830 = vmatpush1.bf16.msra.mxu0 %v771
        %831 = vmatprep.subr.bf16.mxu0 0
        %832 = vmatpush1.bf16.msra.mxu0 %v772
        %833 = vmatprep.subr.bf16.mxu0 0
        %834 = vmatpush1.bf16.msra.mxu0 %v773
        %835 = vmatprep.subr.bf16.mxu0 0
        %836 = vmatpush1.bf16.msra.mxu0 %v774
        %837 = vmatprep.subr.bf16.mxu0 0
        %838 = vmatpush1.bf16.msra.mxu0 %v775
        %839 = vmatprep.subr.bf16.mxu0 0
        %840 = vmatpush1.bf16.msra.mxu0 %v776
        %841 = vmatprep.subr.bf16.mxu0 0
        %842 = vmatpush1.bf16.msra.mxu0 %v777
        %843 = vmatprep.subr.bf16.mxu0 0
        %844 = vmatpush1.bf16.msra.mxu0 %v778
        %845 = vmatprep.subr.bf16.mxu0 0
        %846 = vmatpush1.bf16.msra.mxu0 %v779
        %847 = vmatprep.subr.bf16.mxu0 0
        %848 = vmatpush1.bf16.msra.mxu0 %v780
        %849 = vmatprep.subr.bf16.mxu0 0
        %850 = vmatpush1.bf16.msra.mxu0 %v781
        %851 = vmatprep.subr.bf16.mxu0 0
        %852 = vmatpush1.bf16.msra.mxu0 %v782
        %853 = vmatprep.subr.bf16.mxu0 0
        %854 = vmatpush1.bf16.msra.mxu0 %v783
        %855 = vmatprep.subr.bf16.mxu0 0
        %856 = vmatpush1.bf16.msra.mxu0 %v784
        %857 = vmatprep.mubr.bf16.mxu0 %v794
        %858 = vmatmul.mubr.bf16.gmra.mrb[0].mxu0 %v793
        %v859 = vpop.f32.mrb[0].mxu0
        %v860 = vadd.f32 0.0, %v859
        %v861 = vpop.f32.mrb[0].mxu0
        %v862 = vpop.f32.mrb[0].mxu0
        %v863 = vadd.f32 0.0, %v862
        %v864 = vpop.f32.mrb[0].mxu0
        %865 = vmatprep.mubr.bf16.mxu0 %v796
        %866 = vmatmul.mubr.bf16.gmra.mrb[0].mxu0 %v795
        %v867 = vpop.f32.mrb[0].mxu0
        %v868 = vadd.f32 0.0, %v867
        %v869 = vpop.f32.mrb[0].mxu0
        %v870 = vpop.f32.mrb[0].mxu0
        %v871 = vadd.f32 0.0, %v870
        %v872 = vpop.f32.mrb[0].mxu0
        %873 = vmatprep.mubr.bf16.mxu0 %v798
        %874 = vmatmul.mubr.bf16.gmra.mrb[0].mxu0 %v797
        %v875 = vpop.f32.mrb[0].mxu0
        %v876 = vadd.f32 0.0, %v875
        %v877 = vpop.f32.mrb[0].mxu0
        %v878 = vpop.f32.mrb[0].mxu0
        %v879 = vadd.f32 0.0, %v878
        %v880 = vpop.f32.mrb[0].mxu0
        %881 = vmatprep.mubr.bf16.mxu0 %v800
        %882 = vmatmul.mubr.bf16.gmra.mrb[0].mxu0 %v799
        %v883 = vpop.f32.mrb[0].mxu0
        %v884 = vadd.f32 0.0, %v883
        %v885 = vpop.f32.mrb[0].mxu0
        %v886 = vpop.f32.mrb[0].mxu0
        %v887 = vadd.f32 0.0, %v886
        %v888 = vpop.f32.mrb[0].mxu0
        %889 = vmatprep.mubr.bf16.mxu0 %v802
        %890 = vmatmul.mubr.bf16.gmra.mrb[0].mxu0 %v801
        %v891 = vpop.f32.mrb[0].mxu0
        %v892 = vadd.f32 0.0, %v891
        %v893 = vpop.f32.mrb[0].mxu0
        %v894 = vpop.f32.mrb[0].mxu0
        %v895 = vadd.f32 0.0, %v894
        %v896 = vpop.f32.mrb[0].mxu0
        %897 = vmatprep.mubr.bf16.mxu0 %v804
        %898 = vmatmul.mubr.bf16.gmra.mrb[0].mxu0 %v803
        %v899 = vpop.f32.mrb[0].mxu0
        %v900 = vadd.f32 0.0, %v899
        %v901 = vpop.f32.mrb[0].mxu0
        %v902 = vpop.f32.mrb[0].mxu0
        %v903 = vadd.f32 0.0, %v902
        %v904 = vpop.f32.mrb[0].mxu0
        %905 = vmatprep.mubr.bf16.mxu0 %v806
        %906 = vmatmul.mubr.bf16.gmra.mrb[0].mxu0 %v805
        %v907 = vpop.f32.mrb[0].mxu0
        %v908 = vadd.f32 0.0, %v907
        %v909 = vpop.f32.mrb[0].mxu0
        %v910 = vpop.f32.mrb[0].mxu0
        %v911 = vadd.f32 0.0, %v910
        %v912 = vpop.f32.mrb[0].mxu0
        %913 = vmatprep.mubr.bf16.mxu0 %v808
        %914 = vmatmul.mubr.bf16.gmra.mrb[0].mxu0 %v807
        %v915 = vpop.f32.mrb[0].mxu0
        %v916 = vadd.f32 0.0, %v915
        %v917 = vpop.f32.mrb[0].mxu0
        %v918 = vpop.f32.mrb[0].mxu0
        %v919 = vadd.f32 0.0, %v918
        %v920 = vpop.f32.mrb[0].mxu0
        %921 = vdwg.mxu0
        %v922 = vadd.f32 %v809, %v860
        %v923 = vadd.f32 %v810, %v863
        %v924 = vadd.f32 %v811, %v868
        %v925 = vadd.f32 %v812, %v871
        %v926 = vadd.f32 %v813, %v876
        %v927 = vadd.f32 %v814, %v879
        %v928 = vadd.f32 %v815, %v884
        %v929 = vadd.f32 %v816, %v887
        %v930 = vadd.f32 %v817, %v892
        %v931 = vadd.f32 %v818, %v895
        %v932 = vadd.f32 %v819, %v900
        %v933 = vadd.f32 %v820, %v903
        %v934 = vadd.f32 %v821, %v908
        %v935 = vadd.f32 %v822, %v911
        %v936 = vadd.f32 %v823, %v916
        %v937 = vadd.f32 %v824, %v919
        %938 = vst [vmem:[#allocation2] sm:$0xff] %v922
        %939 = vst [vmem:[#allocation2 + $0x8] sm:$0xff] %v923
        %940 = vst [vmem:[#allocation2 + $0x10] sm:$0xff] %v924
        %941 = vst [vmem:[#allocation2 + $0x18] sm:$0xff] %v925
        %942 = vst [vmem:[#allocation2 + $0x20] sm:$0xff] %v926
        %943 = vst [vmem:[#allocation2 + $0x28] sm:$0xff] %v927
        %944 = vst [vmem:[#allocation2 + $0x30] sm:$0xff] %v928
        %945 = vst [vmem:[#allocation2 + $0x38] sm:$0xff] %v929
        %946 = vst [vmem:[#allocation2 + $0x40] sm:$0xff] %v930
        %947 = vst [vmem:[#allocation2 + $0x48] sm:$0xff] %v931
        %948 = vst [vmem:[#allocation2 + $0x50] sm:$0xff] %v932
        %949 = vst [vmem:[#allocation2 + $0x58] sm:$0xff] %v933
        %950 = vst [vmem:[#allocation2 + $0x60] sm:$0xff] %v934
        %951 = vst [vmem:[#allocation2 + $0x68] sm:$0xff] %v935
        %952 = vst [vmem:[#allocation2 + $0x70] sm:$0xff] %v936
        %953 = vst [vmem:[#allocation2 + $0x78] sm:$0xff] %v937
        // Predicated region
        $region57: #{tpu_custom_call.1} parent=51 // pred_check
          %p954 = pneg %p405
        $region58: #{tpu_custom_call.1} parent=51 // pred_check_branch
          %956 = sbr.rel (%p954) target = $region60
        $region59: #{tpu_custom_call.1} parent=51 // pred_region
          %v957 = vld [vmem:[%s3] sm:$0x1]
          %v958 = vld [vmem:[#allocation2] sm:$0xff]
          %v959 = vld [vmem:[#allocation2 + $0x8] sm:$0xff]
          %v960 = vld [vmem:[#allocation2 + $0x10] sm:$0xff]
          %v961 = vld [vmem:[#allocation2 + $0x18] sm:$0xff]
          %v962 = vld [vmem:[#allocation2 + $0x20] sm:$0xff]
          %v963 = vld [vmem:[#allocation2 + $0x28] sm:$0xff]
          %v964 = vld [vmem:[#allocation2 + $0x30] sm:$0xff]
          %v965 = vld [vmem:[#allocation2 + $0x38] sm:$0xff]
          %v966 = vld [vmem:[#allocation2 + $0x40] sm:$0xff]
          %v967 = vld [vmem:[#allocation2 + $0x48] sm:$0xff]
          %v968 = vld [vmem:[#allocation2 + $0x50] sm:$0xff]
          %v969 = vld [vmem:[#allocation2 + $0x58] sm:$0xff]
          %v970 = vld [vmem:[#allocation2 + $0x60] sm:$0xff]
          %v971 = vld [vmem:[#allocation2 + $0x68] sm:$0xff]
          %v972 = vld [vmem:[#allocation2 + $0x70] sm:$0xff]
          %v973 = vld [vmem:[#allocation2 + $0x78] sm:$0xff]
          %v974 = vmax.f32 %v958, 1.0
          %v975 = vmax.f32 %v959, 1.0
          %v976 = vmax.f32 %v960, 1.0
          %v977 = vmax.f32 %v961, 1.0
          %v978 = vmax.f32 %v962, 1.0
          %v979 = vmax.f32 %v963, 1.0
          %v980 = vmax.f32 %v964, 1.0
          %v981 = vmax.f32 %v965, 1.0
          %v982 = vmax.f32 %v966, 1.0
          %v983 = vmax.f32 %v967, 1.0
          %v984 = vmax.f32 %v968, 1.0
          %v985 = vmax.f32 %v969, 1.0
          %v986 = vmax.f32 %v970, 1.0
          %v987 = vmax.f32 %v971, 1.0
          %v988 = vmax.f32 %v972, 1.0
          %v989 = vmax.f32 %v973, 1.0
          %v990 = vrcp.pop %v974
          %v991 = vrcp.pop %v975
          %v992 = vrcp.pop %v976
          %v993 = vrcp.pop %v977
          %v994 = vrcp.pop %v978
          %v995 = vrcp.pop %v979
          %v996 = vrcp.pop %v980
          %v997 = vrcp.pop %v981
          %v998 = vrcp.pop %v982
          %v999 = vrcp.pop %v983
          %v1000 = vrcp.pop %v984
          %v1001 = vrcp.pop %v985
          %v1002 = vrcp.pop %v986
          %v1003 = vrcp.pop %v987
          %v1004 = vrcp.pop %v988
          %v1005 = vrcp.pop %v989
          %v1006 = vld [vmem:[%s383] sm:$0xf]
          %v1007 = vld [vmem:[%s383 + $0x4] sm:$0xf]
          %v1008 = vld [vmem:[%s383 + $0x8] sm:$0xf]
          %v1009 = vld [vmem:[%s383 + $0xc] sm:$0xf]
          %v1010 = vld [vmem:[%s383 + $0x10] sm:$0xf]
          %v1011 = vld [vmem:[%s383 + $0x14] sm:$0xf]
          %v1012 = vld [vmem:[%s383 + $0x18] sm:$0xf]
          %v1013 = vld [vmem:[%s383 + $0x1c] sm:$0xf]
          %v1014 = vld [vmem:[%s383 + $0x20] sm:$0xf]
          %v1015 = vld [vmem:[%s383 + $0x24] sm:$0xf]
          %v1016 = vld [vmem:[%s383 + $0x28] sm:$0xf]
          %v1017 = vld [vmem:[%s383 + $0x2c] sm:$0xf]
          %v1018 = vld [vmem:[%s383 + $0x30] sm:$0xf]
          %v1019 = vld [vmem:[%s383 + $0x34] sm:$0xf]
          %v1020 = vld [vmem:[%s383 + $0x38] sm:$0xf]
          %v1021 = vld [vmem:[%s383 + $0x3c] sm:$0xf]
          %v1022 = vld [vmem:[%s2] sm:$0xf]
          %v1023 = vld [vmem:[%s2 + $0x4] sm:$0xf]
          %v1024 = vld [vmem:[%s2 + $0x8] sm:$0xf]
          %v1025 = vld [vmem:[%s2 + $0xc] sm:$0x1]
          %v1027 = vlaneseq
          %v1028 = vshrl.u32 %v1027, 7
          %v1029 = vsub.s32 0, %v1028
          %v1030 = vrot.slane %v957, %v1029
          %v1048 = vunpack.c.l.b16 %v1006
          %v1049 = vunpack.c.l.b16 %v1007
          %v1050 = vunpack.c.l.b16 %v1008
          %v1051 = vunpack.c.l.b16 %v1009
          %v1052 = vunpack.c.l.b16 %v1010
          %v1053 = vunpack.c.l.b16 %v1011
          %v1054 = vunpack.c.l.b16 %v1012
          %v1055 = vunpack.c.l.b16 %v1013
          %v1056 = vunpack.c.l.b16 %v1014
          %v1057 = vunpack.c.l.b16 %v1015
          %v1058 = vunpack.c.l.b16 %v1016
          %v1059 = vunpack.c.l.b16 %v1017
          %v1060 = vunpack.c.l.b16 %v1018
          %v1061 = vunpack.c.l.b16 %v1019
          %v1062 = vunpack.c.l.b16 %v1020
          %v1063 = vunpack.c.l.b16 %v1021
          %v1064 = vpack.c.b16 %v1049, %v1048
          %v1065 = vpack.c.b16 %v1051, %v1050
          %v1066 = vpack.c.b16 %v1053, %v1052
          %v1067 = vpack.c.b16 %v1055, %v1054
          %v1068 = vpack.c.b16 %v1057, %v1056
          %v1069 = vpack.c.b16 %v1059, %v1058
          %v1070 = vpack.c.b16 %v1061, %v1060
          %v1071 = vpack.c.b16 %v1063, %v1062
          %v1076 = vunpack.c.l.b16 %v1022
          %v1077 = vunpack.c.l.b16 %v1023
          %v1078 = vunpack.c.l.b16 %v1024
          %v1079 = vunpack.c.l.b16 %v1025
          %v1080 = vpack.c.b16 %v1077, %v1076
          %v1081 = vpack.c.b16 %v1079, %v1078
          %v1084 = vsel %vm552, %v1064, 0
          %v1087 = vsel %vm552, %v1065, 0
          %v1090 = vsel %vm552, %v1066, 0
          %v1093 = vsel %vm552, %v1067, 0
          %v1096 = vsel %vm552, %v1068, 0
          %v1099 = vsel %vm552, %v1069, 0
          %v1102 = vsel %vm552, %v1070, 0
          %v1105 = vsel %vm552, %v1071, 0
          %v1108 = vand.u32 %v1081, %v604
          %1110 = vmatprep.subr.bf16.mxu0 0
          %1111 = vmatpush1.bf16.msra.mxu0 %v1080
          %1112 = vmatprep.subr.bf16.mxu0 0
          %1113 = vmatpush1.bf16.msra.mxu0 %v1108
          %1114 = vmatprep.subr.bf16.mxu0 0
          %1115 = vmatpush1.bf16.msra.mxu0 0
          %1116 = vmatprep.subr.bf16.mxu0 0
          %1117 = vmatpush1.bf16.msra.mxu0 0
          %1118 = vmatprep.subr.bf16.mxu0 0
          %1119 = vmatpush1.bf16.msra.mxu0 0
          %1120 = vmatprep.subr.bf16.mxu0 0
          %1121 = vmatpush1.bf16.msra.mxu0 0
          %1122 = vmatprep.subr.bf16.mxu0 0
          %1123 = vmatpush1.bf16.msra.mxu0 0
          %1124 = vmatprep.subr.bf16.mxu0 0
          %1125 = vmatpush1.bf16.msra.mxu0 0
          %1126 = vmatprep.subr.bf16.mxu0 0
          %1127 = vmatpush1.bf16.msra.mxu0 0
          %1128 = vmatprep.subr.bf16.mxu0 0
          %1129 = vmatpush1.bf16.msra.mxu0 0
          %1130 = vmatprep.subr.bf16.mxu0 0
          %1131 = vmatpush1.bf16.msra.mxu0 0
          %1132 = vmatprep.subr.bf16.mxu0 0
          %1133 = vmatpush1.bf16.msra.mxu0 0
          %1134 = vmatprep.subr.bf16.mxu0 0
          %1135 = vmatpush1.bf16.msra.mxu0 0
          %1136 = vmatprep.subr.bf16.mxu0 0
          %1137 = vmatpush1.bf16.msra.mxu0 0
          %1138 = vmatprep.subr.bf16.mxu0 0
          %1139 = vmatpush1.bf16.msra.mxu0 0
          %1140 = vmatprep.subr.bf16.mxu0 0
          %1141 = vmatpush1.bf16.msra.mxu0 0
          %1142 = vmatprep.mubr.bf16.mxu0 0
          %1143 = vmatmul.mubr.bf16.gmra.mrb[0].mxu0 %v1084
          %v1144 = vpop.f32.mrb[0].mxu0
          %v1145 = vadd.f32 %v1030, %v1144
          %v1146 = vpop.f32.mrb[0].mxu0
          %v1147 = vpop.f32.mrb[0].mxu0
          %v1148 = vadd.f32 %v1030, %v1147
          %v1149 = vpop.f32.mrb[0].mxu0
          %1150 = vmatprep.mubr.bf16.mxu0 0
          %1151 = vmatmul.mubr.bf16.gmra.mrb[0].mxu0 %v1087
          %v1152 = vpop.f32.mrb[0].mxu0
          %v1153 = vadd.f32 %v1030, %v1152
          %v1154 = vpop.f32.mrb[0].mxu0
          %v1155 = vpop.f32.mrb[0].mxu0
          %v1156 = vadd.f32 %v1030, %v1155
          %v1157 = vpop.f32.mrb[0].mxu0
          %1158 = vmatprep.mubr.bf16.mxu0 0
          %1159 = vmatmul.mubr.bf16.gmra.mrb[0].mxu0 %v1090
          %v1160 = vpop.f32.mrb[0].mxu0
          %v1161 = vadd.f32 %v1030, %v1160
          %v1162 = vpop.f32.mrb[0].mxu0
          %v1163 = vpop.f32.mrb[0].mxu0
          %v1164 = vadd.f32 %v1030, %v1163
          %v1165 = vpop.f32.mrb[0].mxu0
          %1166 = vmatprep.mubr.bf16.mxu0 0
          %1167 = vmatmul.mubr.bf16.gmra.mrb[0].mxu0 %v1093
          %v1168 = vpop.f32.mrb[0].mxu0
          %v1169 = vadd.f32 %v1030, %v1168
          %v1170 = vpop.f32.mrb[0].mxu0
          %v1171 = vpop.f32.mrb[0].mxu0
          %v1172 = vadd.f32 %v1030, %v1171
          %v1173 = vpop.f32.mrb[0].mxu0
          %1174 = vmatprep.mubr.bf16.mxu0 0
          %1175 = vmatmul.mubr.bf16.gmra.mrb[0].mxu0 %v1096
          %v1176 = vpop.f32.mrb[0].mxu0
          %v1177 = vadd.f32 %v1030, %v1176
          %v1178 = vpop.f32.mrb[0].mxu0
          %v1179 = vpop.f32.mrb[0].mxu0
          %v1180 = vadd.f32 %v1030, %v1179
          %v1181 = vpop.f32.mrb[0].mxu0
          %1182 = vmatprep.mubr.bf16.mxu0 0
          %1183 = vmatmul.mubr.bf16.gmra.mrb[0].mxu0 %v1099
          %v1184 = vpop.f32.mrb[0].mxu0
          %v1185 = vadd.f32 %v1030, %v1184
          %v1186 = vpop.f32.mrb[0].mxu0
          %v1187 = vpop.f32.mrb[0].mxu0
          %v1188 = vadd.f32 %v1030, %v1187
          %v1189 = vpop.f32.mrb[0].mxu0
          %1190 = vmatprep.mubr.bf16.mxu0 0
          %1191 = vmatmul.mubr.bf16.gmra.mrb[0].mxu0 %v1102
          %v1192 = vpop.f32.mrb[0].mxu0
          %v1193 = vadd.f32 %v1030, %v1192
          %v1194 = vpop.f32.mrb[0].mxu0
          %v1195 = vpop.f32.mrb[0].mxu0
          %v1196 = vadd.f32 %v1030, %v1195
          %v1197 = vpop.f32.mrb[0].mxu0
          %1198 = vmatprep.mubr.bf16.mxu0 0
          %1199 = vmatmul.mubr.bf16.gmra.mrb[0].mxu0 %v1105
          %v1200 = vpop.f32.mrb[0].mxu0
          %v1201 = vadd.f32 %v1030, %v1200
          %v1202 = vpop.f32.mrb[0].mxu0
          %v1203 = vpop.f32.mrb[0].mxu0
          %v1204 = vadd.f32 %v1030, %v1203
          %v1205 = vpop.f32.mrb[0].mxu0
          %1206 = vdwg.mxu0
          %1208 = vset.pattern.permute.xlu0 24
          %1209 = vperm.xlu0 %1208, %v958
          %v1210 = vpop.permute.xlu0 %1209
          %1213 = vset.pattern.permute.xlu0 24
          %1214 = vperm.xlu0 %1213, %v959
          %v1215 = vpop.permute.xlu0 %1214
          %1218 = vset.pattern.permute.xlu0 24
          %1219 = vperm.xlu0 %1218, %v960
          %v1220 = vpop.permute.xlu0 %1219
          %1223 = vset.pattern.permute.xlu0 24
          %1224 = vperm.xlu0 %1223, %v961
          %v1225 = vpop.permute.xlu0 %1224
          %1228 = vset.pattern.permute.xlu0 24
          %1229 = vperm.xlu0 %1228, %v962
          %v1230 = vpop.permute.xlu0 %1229
          %1233 = vset.pattern.permute.xlu0 24
          %1234 = vperm.xlu0 %1233, %v963
          %v1235 = vpop.permute.xlu0 %1234
          %1238 = vset.pattern.permute.xlu0 24
          %1239 = vperm.xlu0 %1238, %v964
          %v1240 = vpop.permute.xlu0 %1239
          %1243 = vset.pattern.permute.xlu0 24
          %1244 = vperm.xlu0 %1243, %v965
          %v1245 = vpop.permute.xlu0 %1244
          %1248 = vset.pattern.permute.xlu0 24
          %1249 = vperm.xlu0 %1248, %v966
          %v1250 = vpop.permute.xlu0 %1249
          %1253 = vset.pattern.permute.xlu0 24
          %1254 = vperm.xlu0 %1253, %v967
          %v1255 = vpop.permute.xlu0 %1254
          %1258 = vset.pattern.permute.xlu0 24
          %1259 = vperm.xlu0 %1258, %v968
          %v1260 = vpop.permute.xlu0 %1259
          %1263 = vset.pattern.permute.xlu0 24
          %1264 = vperm.xlu0 %1263, %v969
          %v1265 = vpop.permute.xlu0 %1264
          %1268 = vset.pattern.permute.xlu0 24
          %1269 = vperm.xlu0 %1268, %v970
          %v1270 = vpop.permute.xlu0 %1269
          %1273 = vset.pattern.permute.xlu0 24
          %1274 = vperm.xlu0 %1273, %v971
          %v1275 = vpop.permute.xlu0 %1274
          %1278 = vset.pattern.permute.xlu0 24
          %1279 = vperm.xlu0 %1278, %v972
          %v1280 = vpop.permute.xlu0 %1279
          %1283 = vset.pattern.permute.xlu0 24
          %1284 = vperm.xlu0 %1283, %v973
          %v1285 = vpop.permute.xlu0 %1284
          %v1287 = vmul.f32 %v1210, %v1030
          %v1288 = vmul.f32 %v1215, %v1030
          %v1289 = vmul.f32 %v1220, %v1030
          %v1290 = vmul.f32 %v1225, %v1030
          %v1291 = vmul.f32 %v1230, %v1030
          %v1292 = vmul.f32 %v1235, %v1030
          %v1293 = vmul.f32 %v1240, %v1030
          %v1294 = vmul.f32 %v1245, %v1030
          %v1295 = vmul.f32 %v1250, %v1030
          %v1296 = vmul.f32 %v1255, %v1030
          %v1297 = vmul.f32 %v1260, %v1030
          %v1298 = vmul.f32 %v1265, %v1030
          %v1299 = vmul.f32 %v1270, %v1030
          %v1300 = vmul.f32 %v1275, %v1030
          %v1301 = vmul.f32 %v1280, %v1030
          %v1302 = vmul.f32 %v1285, %v1030
          %v1303 = vadd.f32 %v958, %v1287
          %v1304 = vadd.f32 %v959, %v1288
          %v1305 = vadd.f32 %v960, %v1289
          %v1306 = vadd.f32 %v961, %v1290
          %v1307 = vadd.f32 %v962, %v1291
          %v1308 = vadd.f32 %v963, %v1292
          %v1309 = vadd.f32 %v964, %v1293
          %v1310 = vadd.f32 %v965, %v1294
          %v1311 = vadd.f32 %v966, %v1295
          %v1312 = vadd.f32 %v967, %v1296
          %v1313 = vadd.f32 %v968, %v1297
          %v1314 = vadd.f32 %v969, %v1298
          %v1315 = vadd.f32 %v970, %v1299
          %v1316 = vadd.f32 %v971, %v1300
          %v1317 = vadd.f32 %v972, %v1301
          %v1318 = vadd.f32 %v973, %v1302
          %1320 = vset.pattern.permute.xlu0 24
          %1321 = vperm.xlu0 %1320, %v990
          %v1322 = vpop.permute.xlu0 %1321
          %1325 = vset.pattern.permute.xlu0 24
          %1326 = vperm.xlu0 %1325, %v991
          %v1327 = vpop.permute.xlu0 %1326
          %1330 = vset.pattern.permute.xlu0 24
          %1331 = vperm.xlu0 %1330, %v992
          %v1332 = vpop.permute.xlu0 %1331
          %1335 = vset.pattern.permute.xlu0 24
          %1336 = vperm.xlu0 %1335, %v993
          %v1337 = vpop.permute.xlu0 %1336
          %1340 = vset.pattern.permute.xlu0 24
          %1341 = vperm.xlu0 %1340, %v994
          %v1342 = vpop.permute.xlu0 %1341
          %1345 = vset.pattern.permute.xlu0 24
          %1346 = vperm.xlu0 %1345, %v995
          %v1347 = vpop.permute.xlu0 %1346
          %1350 = vset.pattern.permute.xlu0 24
          %1351 = vperm.xlu0 %1350, %v996
          %v1352 = vpop.permute.xlu0 %1351
          %1355 = vset.pattern.permute.xlu0 24
          %1356 = vperm.xlu0 %1355, %v997
          %v1357 = vpop.permute.xlu0 %1356
          %1360 = vset.pattern.permute.xlu0 24
          %1361 = vperm.xlu0 %1360, %v998
          %v1362 = vpop.permute.xlu0 %1361
          %1365 = vset.pattern.permute.xlu0 24
          %1366 = vperm.xlu0 %1365, %v999
          %v1367 = vpop.permute.xlu0 %1366
          %1370 = vset.pattern.permute.xlu0 24
          %1371 = vperm.xlu0 %1370, %v1000
          %v1372 = vpop.permute.xlu0 %1371
          %1375 = vset.pattern.permute.xlu0 24
          %1376 = vperm.xlu0 %1375, %v1001
          %v1377 = vpop.permute.xlu0 %1376
          %1380 = vset.pattern.permute.xlu0 24
          %1381 = vperm.xlu0 %1380, %v1002
          %v1382 = vpop.permute.xlu0 %1381
          %1385 = vset.pattern.permute.xlu0 24
          %1386 = vperm.xlu0 %1385, %v1003
          %v1387 = vpop.permute.xlu0 %1386
          %1390 = vset.pattern.permute.xlu0 24
          %1391 = vperm.xlu0 %1390, %v1004
          %v1392 = vpop.permute.xlu0 %1391
          %1395 = vset.pattern.permute.xlu0 24
          %1396 = vperm.xlu0 %1395, %v1005
          %v1397 = vpop.permute.xlu0 %1396
          %v1399 = vmul.f32 %v1303, %v1322
          %v1400 = vmul.f32 %v1304, %v1327
          %v1401 = vmul.f32 %v1305, %v1332
          %v1402 = vmul.f32 %v1306, %v1337
          %v1403 = vmul.f32 %v1307, %v1342
          %v1404 = vmul.f32 %v1308, %v1347
          %v1405 = vmul.f32 %v1309, %v1352
          %v1406 = vmul.f32 %v1310, %v1357
          %v1407 = vmul.f32 %v1311, %v1362
          %v1408 = vmul.f32 %v1312, %v1367
          %v1409 = vmul.f32 %v1313, %v1372
          %v1410 = vmul.f32 %v1314, %v1377
          %v1411 = vmul.f32 %v1315, %v1382
          %v1412 = vmul.f32 %v1316, %v1387
          %v1413 = vmul.f32 %v1317, %v1392
          %v1414 = vmul.f32 %v1318, %v1397
          %v1415 = vsub.f32 %v1145, %v1399
          %v1416 = vsub.f32 %v1148, %v1400
          %v1417 = vsub.f32 %v1153, %v1401
          %v1418 = vsub.f32 %v1156, %v1402
          %v1419 = vsub.f32 %v1161, %v1403
          %v1420 = vsub.f32 %v1164, %v1404
          %v1421 = vsub.f32 %v1169, %v1405
          %v1422 = vsub.f32 %v1172, %v1406
          %v1423 = vsub.f32 %v1177, %v1407
          %v1424 = vsub.f32 %v1180, %v1408
          %v1425 = vsub.f32 %v1185, %v1409
          %v1426 = vsub.f32 %v1188, %v1410
          %v1427 = vsub.f32 %v1193, %v1411
          %v1428 = vsub.f32 %v1196, %v1412
          %v1429 = vsub.f32 %v1201, %v1413
          %v1430 = vsub.f32 %v1204, %v1414
          %v1431 = vld [vmem:[%s401] sm:$0xf]
          %v1432 = vld [vmem:[%s401 + $0x4] sm:$0xf]
          %v1433 = vld [vmem:[%s401 + $0x8] sm:$0xf]
          %v1434 = vld [vmem:[%s401 + $0xc] sm:$0xf]
          %v1435 = vld [vmem:[%s401 + $0x10] sm:$0xf]
          %v1436 = vld [vmem:[%s401 + $0x14] sm:$0xf]
          %v1437 = vld [vmem:[%s401 + $0x18] sm:$0xf]
          %v1438 = vld [vmem:[%s401 + $0x1c] sm:$0xf]
          %v1439 = vld [vmem:[%s401 + $0x20] sm:$0xf]
          %v1440 = vld [vmem:[%s401 + $0x24] sm:$0xf]
          %v1441 = vld [vmem:[%s401 + $0x28] sm:$0xf]
          %v1442 = vld [vmem:[%s401 + $0x2c] sm:$0xf]
          %v1443 = vld [vmem:[%s401 + $0x30] sm:$0xf]
          %v1444 = vld [vmem:[%s401 + $0x34] sm:$0xf]
          %v1445 = vld [vmem:[%s401 + $0x38] sm:$0xf]
          %v1446 = vld [vmem:[%s401 + $0x3c] sm:$0xf]
          %v1447 = vld [vmem:[%s6] sm:$0xf]
          %v1448 = vld [vmem:[%s6 + $0x4] sm:$0xf]
          %v1449 = vld [vmem:[%s7] sm:$0x1]
          %v1451 = vlaneseq
          %v1452 = vshrl.u32 %v1451, 7
          %v1453 = vsub.s32 0, %v1452
          %v1454 = vrot.slane %v1449, %v1453
          %v1472 = vunpack.c.l.b16 %v1431
          %v1473 = vunpack.c.l.b16 %v1432
          %v1474 = vunpack.c.l.b16 %v1433
          %v1475 = vunpack.c.l.b16 %v1434
          %v1476 = vunpack.c.l.b16 %v1435
          %v1477 = vunpack.c.l.b16 %v1436
          %v1478 = vunpack.c.l.b16 %v1437
          %v1479 = vunpack.c.l.b16 %v1438
          %v1480 = vunpack.c.l.b16 %v1439
          %v1481 = vunpack.c.l.b16 %v1440
          %v1482 = vunpack.c.l.b16 %v1441
          %v1483 = vunpack.c.l.b16 %v1442
          %v1484 = vunpack.c.l.b16 %v1443
          %v1485 = vunpack.c.l.b16 %v1444
          %v1486 = vunpack.c.l.b16 %v1445
          %v1487 = vunpack.c.l.b16 %v1446
          %v1488 = vpack.c.b16 %v1473, %v1472
          %v1489 = vpack.c.b16 %v1475, %v1474
          %v1490 = vpack.c.b16 %v1477, %v1476
          %v1491 = vpack.c.b16 %v1479, %v1478
          %v1492 = vpack.c.b16 %v1481, %v1480
          %v1493 = vpack.c.b16 %v1483, %v1482
          %v1494 = vpack.c.b16 %v1485, %v1484
          %v1495 = vpack.c.b16 %v1487, %v1486
          %v1498 = vunpack.c.l.b16 %v1447
          %v1499 = vunpack.c.l.b16 %v1448
          %v1500 = vpack.c.b16 %v1499, %v1498
          %vm1502 = vcmask 130048
          %v1504 = vsel %vm1502, %v1488, 0
          %v1507 = vsel %vm1502, %v1489, 0
          %v1510 = vsel %vm1502, %v1490, 0
          %v1513 = vsel %vm1502, %v1491, 0
          %v1516 = vsel %vm1502, %v1492, 0
          %v1519 = vsel %vm1502, %v1493, 0
          %v1522 = vsel %vm1502, %v1494, 0
          %v1525 = vsel %vm1502, %v1495, 0
          %1527 = vmatprep.subr.bf16.mxu0 0
          %1528 = vmatpush1.bf16.msra.mxu0 %v1500
          %1529 = vmatprep.subr.bf16.mxu0 0
          %1530 = vmatpush1.bf16.msra.mxu0 0
          %1531 = vmatprep.subr.bf16.mxu0 0
          %1532 = vmatpush1.bf16.msra.mxu0 0
          %1533 = vmatprep.subr.bf16.mxu0 0
          %1534 = vmatpush1.bf16.msra.mxu0 0
          %1535 = vmatprep.subr.bf16.mxu0 0
          %1536 = vmatpush1.bf16.msra.mxu0 0
          %1537 = vmatprep.subr.bf16.mxu0 0
          %1538 = vmatpush1.bf16.msra.mxu0 0
          %1539 = vmatprep.subr.bf16.mxu0 0
          %1540 = vmatpush1.bf16.msra.mxu0 0
          %1541 = vmatprep.subr.bf16.mxu0 0
          %1542 = vmatpush1.bf16.msra.mxu0 0
          %1543 = vmatprep.subr.bf16.mxu0 0
          %1544 = vmatpush1.bf16.msra.mxu0 0
          %1545 = vmatprep.subr.bf16.mxu0 0
          %1546 = vmatpush1.bf16.msra.mxu0 0
          %1547 = vmatprep.subr.bf16.mxu0 0
          %1548 = vmatpush1.bf16.msra.mxu0 0
          %1549 = vmatprep.subr.bf16.mxu0 0
          %1550 = vmatpush1.bf16.msra.mxu0 0
          %1551 = vmatprep.subr.bf16.mxu0 0
          %1552 = vmatpush1.bf16.msra.mxu0 0
          %1553 = vmatprep.subr.bf16.mxu0 0
          %1554 = vmatpush1.bf16.msra.mxu0 0
          %1555 = vmatprep.subr.bf16.mxu0 0
          %1556 = vmatpush1.bf16.msra.mxu0 0
          %1557 = vmatprep.subr.bf16.mxu0 0
          %1558 = vmatpush1.bf16.msra.mxu0 0
          %1559 = vmatprep.mubr.bf16.mxu0 0
          %1560 = vmatmul.mubr.bf16.gmra.mrb[0].mxu0 %v1504
          %v1561 = vpop.f32.mrb[0].mxu0
          %v1562 = vadd.f32 %v1454, %v1561
          %v1563 = vpop.f32.mrb[0].mxu0
          %v1564 = vpop.f32.mrb[0].mxu0
          %v1565 = vadd.f32 %v1454, %v1564
          %v1566 = vpop.f32.mrb[0].mxu0
          %1567 = vmatprep.mubr.bf16.mxu0 0
          %1568 = vmatmul.mubr.bf16.gmra.mrb[0].mxu0 %v1507
          %v1569 = vpop.f32.mrb[0].mxu0
          %v1570 = vadd.f32 %v1454, %v1569
          %v1571 = vpop.f32.mrb[0].mxu0
          %v1572 = vpop.f32.mrb[0].mxu0
          %v1573 = vadd.f32 %v1454, %v1572
          %v1574 = vpop.f32.mrb[0].mxu0
          %1575 = vmatprep.mubr.bf16.mxu0 0
          %1576 = vmatmul.mubr.bf16.gmra.mrb[0].mxu0 %v1510
          %v1577 = vpop.f32.mrb[0].mxu0
          %v1578 = vadd.f32 %v1454, %v1577
          %v1579 = vpop.f32.mrb[0].mxu0
          %v1580 = vpop.f32.mrb[0].mxu0
          %v1581 = vadd.f32 %v1454, %v1580
          %v1582 = vpop.f32.mrb[0].mxu0
          %1583 = vmatprep.mubr.bf16.mxu0 0
          %1584 = vmatmul.mubr.bf16.gmra.mrb[0].mxu0 %v1513
          %v1585 = vpop.f32.mrb[0].mxu0
          %v1586 = vadd.f32 %v1454, %v1585
          %v1587 = vpop.f32.mrb[0].mxu0
          %v1588 = vpop.f32.mrb[0].mxu0
          %v1589 = vadd.f32 %v1454, %v1588
          %v1590 = vpop.f32.mrb[0].mxu0
          %1591 = vmatprep.mubr.bf16.mxu0 0
          %1592 = vmatmul.mubr.bf16.gmra.mrb[0].mxu0 %v1516
          %v1593 = vpop.f32.mrb[0].mxu0
          %v1594 = vadd.f32 %v1454, %v1593
          %v1595 = vpop.f32.mrb[0].mxu0
          %v1596 = vpop.f32.mrb[0].mxu0
          %v1597 = vadd.f32 %v1454, %v1596
          %v1598 = vpop.f32.mrb[0].mxu0
          %1599 = vmatprep.mubr.bf16.mxu0 0
          %1600 = vmatmul.mubr.bf16.gmra.mrb[0].mxu0 %v1519
          %v1601 = vpop.f32.mrb[0].mxu0
          %v1602 = vadd.f32 %v1454, %v1601
          %v1603 = vpop.f32.mrb[0].mxu0
          %v1604 = vpop.f32.mrb[0].mxu0
          %v1605 = vadd.f32 %v1454, %v1604
          %v1606 = vpop.f32.mrb[0].mxu0
          %1607 = vmatprep.mubr.bf16.mxu0 0
          %1608 = vmatmul.mubr.bf16.gmra.mrb[0].mxu0 %v1522
          %v1609 = vpop.f32.mrb[0].mxu0
          %v1610 = vadd.f32 %v1454, %v1609
          %v1611 = vpop.f32.mrb[0].mxu0
          %v1612 = vpop.f32.mrb[0].mxu0
          %v1613 = vadd.f32 %v1454, %v1612
          %v1614 = vpop.f32.mrb[0].mxu0
          %1615 = vmatprep.mubr.bf16.mxu0 0
          %1616 = vmatmul.mubr.bf16.gmra.mrb[0].mxu0 %v1525
          %v1617 = vpop.f32.mrb[0].mxu0
          %v1618 = vadd.f32 %v1454, %v1617
          %v1619 = vpop.f32.mrb[0].mxu0
          %v1620 = vpop.f32.mrb[0].mxu0
          %v1621 = vadd.f32 %v1454, %v1620
          %v1622 = vpop.f32.mrb[0].mxu0
          %1623 = vdwg.mxu0
          %v1624 = vadd.f32 %v1415, %v1562
          %v1625 = vadd.f32 %v1416, %v1565
          %v1626 = vadd.f32 %v1417, %v1570
          %v1627 = vadd.f32 %v1418, %v1573
          %v1628 = vadd.f32 %v1419, %v1578
          %v1629 = vadd.f32 %v1420, %v1581
          %v1630 = vadd.f32 %v1421, %v1586
          %v1631 = vadd.f32 %v1422, %v1589
          %v1632 = vadd.f32 %v1423, %v1594
          %v1633 = vadd.f32 %v1424, %v1597
          %v1634 = vadd.f32 %v1425, %v1602
          %v1635 = vadd.f32 %v1426, %v1605
          %v1636 = vadd.f32 %v1427, %v1610
          %v1637 = vadd.f32 %v1428, %v1613
          %v1638 = vadd.f32 %v1429, %v1618
          %v1639 = vadd.f32 %v1430, %v1621
          %v1640 = vmax.f32 %v1624, 0.0
          %v1641 = vmax.f32 %v1625, 0.0
          %v1642 = vmax.f32 %v1626, 0.0
          %v1643 = vmax.f32 %v1627, 0.0
          %v1644 = vmax.f32 %v1628, 0.0
          %v1645 = vmax.f32 %v1629, 0.0
          %v1646 = vmax.f32 %v1630, 0.0
          %v1647 = vmax.f32 %v1631, 0.0
          %v1648 = vmax.f32 %v1632, 0.0
          %v1649 = vmax.f32 %v1633, 0.0
          %v1650 = vmax.f32 %v1634, 0.0
          %v1651 = vmax.f32 %v1635, 0.0
          %v1652 = vmax.f32 %v1636, 0.0
          %v1653 = vmax.f32 %v1637, 0.0
          %v1654 = vmax.f32 %v1638, 0.0
          %v1655 = vmax.f32 %v1639, 0.0
          %1656 = vst [vmem:[%s372] sm:$0xff] %v1640
          %1657 = vst [vmem:[%s372 + $0x8] sm:$0xff] %v1641
          %1658 = vst [vmem:[%s372 + $0x10] sm:$0xff] %v1642
          %1659 = vst [vmem:[%s372 + $0x18] sm:$0xff] %v1643
          %1660 = vst [vmem:[%s372 + $0x20] sm:$0xff] %v1644
          %1661 = vst [vmem:[%s372 + $0x28] sm:$0xff] %v1645
          %1662 = vst [vmem:[%s372 + $0x30] sm:$0xff] %v1646
          %1663 = vst [vmem:[%s372 + $0x38] sm:$0xff] %v1647
          %1664 = vst [vmem:[%s372 + $0x40] sm:$0xff] %v1648
          %1665 = vst [vmem:[%s372 + $0x48] sm:$0xff] %v1649
          %1666 = vst [vmem:[%s372 + $0x50] sm:$0xff] %v1650
          %1667 = vst [vmem:[%s372 + $0x58] sm:$0xff] %v1651
          %1668 = vst [vmem:[%s372 + $0x60] sm:$0xff] %v1652
          %1669 = vst [vmem:[%s372 + $0x68] sm:$0xff] %v1653
          %1670 = vst [vmem:[%s372 + $0x70] sm:$0xff] %v1654
          %1671 = vst [vmem:[%s372 + $0x78] sm:$0xff] %v1655
        $region60: #{tpu_custom_call.1} parent=51 // pred_fallthru
          _
        %s1672 = sand.u32 %s232, 1
        %s1673 = scalar_lea.sflag [#allocation5], %s1672
        %s1674 = sand.u32 %s232, 1
        %s1675 = smul.addr %s1674, 128
        %s1676 = scalar_lea.vmem [#allocation4], %s1675
        // Predicated region
        $region61: #{tpu_custom_call.1} parent=51 // pred_check
          %p1677 = pneg %p242
        $region62: #{tpu_custom_call.1} parent=51 // pred_check_branch
          %1679 = sbr.rel (%p1677) target = $region64
        $region63: #{tpu_custom_call.1} parent=51 // pred_region
          %s1680 = smul.u32 16, %s26
          %s1682 = ssub.s32 2048, 2048
          %1683 = vsyncadd %s1673, %s1682
          %s1684 = smul.addr %s1680, 128
          %s1685 = scalar_lea.hbm %s8, %s1684
          %s1686 = sshll.u32 %s1676, 4
          %s1687 = int_to_ptr.vmem [resolvable:$true] %s1686
          %1692 = dma.vmem_to_hbm [thread:$0]  %s1687, 2048, %s1685, %s1673, 128, 128, 8
        $region64: #{tpu_custom_call.1} parent=51 // pred_fallthru
          _
      $region52: #{tpu_custom_call.1} parent=5 // pred_fallthru
        _
      %p1693 = scmp.le.s32.totalorder 2, %s17
      // Predicated region
      $region65: #{tpu_custom_call.1} parent=5 // pred_check
        %p1694 = pneg %p1693
      $region66: #{tpu_custom_call.1} parent=5 // pred_check_branch
        %1696 = sbr.rel (%p1694) target = $region68
      $region67: #{tpu_custom_call.1} parent=5 // pred_region
        %s1697 = ssub.s32 %s17, 2
        // Predicated region
        $region69: #{tpu_custom_call.1} parent=67 // pred_check
          %p1698 = pneg %p248
        $region70: #{tpu_custom_call.1} parent=67 // pred_check_branch
          %1700 = sbr.rel (%p1698) target = $region72
        $region71: #{tpu_custom_call.1} parent=67 // pred_region
          %s1701 = sand.u32 %s233, 1
          %s1702 = scalar_lea.sflag [#allocation5], %s1701
          %s1703 = sand.u32 %s233, 1
          %s1704 = smul.addr %s1703, 128
          %s1705 = scalar_lea.vmem [#allocation4], %s1704
          %1706 = dma.done %s1702, 2048
        $region72: #{tpu_custom_call.1} parent=67 // pred_fallthru
          _
      $region68: #{tpu_custom_call.1} parent=5 // pred_fallthru
        _
    $region6: #{tpu_custom_call.1} parent=1 // loop_footer
      %s21 = sadd.s32 1, %s17
    $region7: #{tpu_custom_call.1} parent=1 // loop_footer_branch
      %16 = sbr.rel target = $region3
    $region8: #{tpu_custom_call.1} parent=1 // loop_exit
      _
    %1707 = vsyncpa [#allocation5], 1
    %s1708 = scalar_lea.sflag [#allocation5], 1
    %1709 = vsyncpa %s1708, 1

</llo_original>
